<compile_context>
chip_gen: v7x
topology: tpu7x:2x2x1
jax: 0.10.0
libtpu: 0.0.40
codegen_flags: <defaults>
</compile_context>

<pallas_src>
import functools
import math

import jax
import jax.numpy as jnp
from jax.experimental import pallas as pl
from jax.experimental.pallas import tpu as pltpu


EMB_DIM = 32
NUM_HEADS = 4
HEAD_DIM = EMB_DIM // NUM_HEADS


def _attention_kernel(x_ref, wqkv_ref, bqkv_ref, wo_ref, bo_ref, o_ref,
                      *, tb, seq, emb, heads, head_dim):
    """One grid step = TB batch elements, fully resident in VMEM.

    x_ref    : (TB, S, 3E)  -- [q | k | v] concatenated on the embedding axis
    wqkv_ref : (3E, 3E)     -- block-diagonal [Wq^T, Wk^T, Wv^T]
    bqkv_ref : (1, 3E)      -- [bq | bk | bv]
    wo_ref   : (E, E)       -- Wo^T
    bo_ref   : (1, E)
    o_ref    : (TB, S, E)
    """
    m = tb * seq
    x = x_ref[...].reshape(m, 3 * emb)

    # Single fused QKV projection (one MXU matmul instead of three tiny ones).
    qkv = jnp.dot(x, wqkv_ref[...], preferred_element_type=jnp.float32) + bqkv_ref[...]
    qkv = qkv.reshape(tb, seq, 3 * emb)

    wo = wo_ref[...]
    scale = 1.0 / math.sqrt(head_dim)

    # Per-head attention, batched over the TB batch elements of this block.
    # Static 4-iteration Python loop; each iteration issues batched einsums
    # (single batch dim) rather than per-batch micro-matmuls.
    out_acc = jnp.zeros((m, emb), jnp.float32)
    for h in range(heads):
        lo = h * head_dim
        q_h = qkv[:, :, lo:lo + head_dim]                          # (TB, S, D)
        k_h = qkv[:, :, emb + lo:emb + lo + head_dim]              # (TB, S, D)
        v_h = qkv[:, :, 2 * emb + lo:2 * emb + lo + head_dim]      # (TB, S, D)

        s = jnp.einsum("bqd,bkd->bqk", q_h, k_h,
                       preferred_element_type=jnp.float32) * scale  # (TB, S, S)
        # TODO(synk): mask_input is assumed None (no attention mask path implemented).
        s = s - jnp.max(s, axis=-1, keepdims=True)
        p = jnp.exp(s)
        p = p * pl.reciprocal(jnp.sum(p, axis=-1, keepdims=True), approx=True)
        # TODO(synk): attn dropout is identity in eval mode; stored_attn is not materialized.

        ctx_h = jnp.einsum("bqk,bkd->bqd", p, v_h,
                           preferred_element_type=jnp.float32)       # (TB, S, D)

        # Fold the output projection into the head loop: out += ctx_h @ Wo^T[hD:(h+1)D, :]
        out_acc = out_acc + jnp.dot(ctx_h.reshape(m, head_dim),
                                    wo[lo:lo + head_dim, :],
                                    preferred_element_type=jnp.float32)

    out = out_acc + bo_ref[...]
    o_ref[...] = out.reshape(tb, seq, emb).astype(o_ref.dtype)


def fuse_params(params):
    """Init-time weight prep: transpose + fuse so the per-call hot path does none of it."""
    emb = params["wq"].shape[0]
    w_qkv = jnp.zeros((3 * emb, 3 * emb), jnp.float32)
    w_qkv = w_qkv.at[0:emb, 0:emb].set(params["wq"].T)
    w_qkv = w_qkv.at[emb:2 * emb, emb:2 * emb].set(params["wk"].T)
    w_qkv = w_qkv.at[2 * emb:, 2 * emb:].set(params["wv"].T)
    b_qkv = jnp.concatenate([params["bq"], params["bk"], params["bv"]]).reshape(1, 3 * emb)
    return {
        "w_qkv": w_qkv,
        "b_qkv": b_qkv,
        "w_o": params["wo"].T,
        "b_o": params["bo"].reshape(1, emb),
    }


def _pick_batch_block(batch, seq):
    """Fold batch elements per grid step so the matmul M-dim is ~256 rows (and divides B)."""
    tb = max(1, min(batch, 256 // max(seq, 1)))
    while batch % tb:
        tb -= 1
    return tb


@functools.partial(jax.jit, static_argnames=("num_heads",))
def parallel_attention_block(q_vec, k_vec, v_vec, fused, num_heads=NUM_HEADS):
    """Pallas implementation of ParallelAttentionBlock.forward (mask_input=None, eval mode)."""
    B, S, E = q_vec.shape
    head_dim = E // num_heads
    tb = _pick_batch_block(B, S)
    grid = (B // tb,)

    # Concatenate q/k/v once in the wrapper: 1 sequence input (96-wide) instead of 3.
    x_cat = jnp.concatenate([q_vec, k_vec, v_vec], axis=-1)  # (B, S, 3E)

    kernel = functools.partial(_attention_kernel, tb=tb, seq=S, emb=E,
                               heads=num_heads, head_dim=head_dim)

    seq_in_spec = pl.BlockSpec((tb, S, 3 * E), lambda b: (b, 0, 0))
    out_spec = pl.BlockSpec((tb, S, E), lambda b: (b, 0, 0))
    wqkv_spec = pl.BlockSpec((3 * E, 3 * E), lambda b: (0, 0))
    bqkv_spec = pl.BlockSpec((1, 3 * E), lambda b: (0, 0))
    wo_spec = pl.BlockSpec((E, E), lambda b: (0, 0))
    bo_spec = pl.BlockSpec((1, E), lambda b: (0, 0))

    return pl.pallas_call(
        kernel,
        out_shape=jax.ShapeDtypeStruct((B, S, E), q_vec.dtype),
        grid_spec=pltpu.PrefetchScalarGridSpec(
            num_scalar_prefetch=0,
            grid=grid,
            in_specs=[seq_in_spec, wqkv_spec, bqkv_spec, wo_spec, bo_spec],
            out_specs=out_spec,
        ),
        compiler_params=pltpu.CompilerParams(
            dimension_semantics=("parallel",),  # v7x: batch blocks shard across the 2 TCs when grid > 1
        ),
    )(x_cat, fused["w_qkv"], fused["b_qkv"], fused["w_o"], fused["b_o"])


def _reference(q_vec, k_vec, v_vec, params):
    """Plain-JAX reference mirroring the PyTorch forward (eval mode, no mask)."""
    B, S, E = q_vec.shape
    H, D = NUM_HEADS, HEAD_DIM

    def lin(x, w, b):
        return jnp.einsum("bse,oe->bso", x, w) + b

    q = lin(q_vec, params["wq"], params["bq"]).reshape(B, S, H, D).transpose(0, 2, 1, 3)
    k = lin(k_vec, params["wk"], params["bk"]).reshape(B, S, H, D).transpose(0, 2, 1, 3)
    v = lin(v_vec, params["wv"], params["bv"]).reshape(B, S, H, D).transpose(0, 2, 1, 3)
    energy = jnp.einsum("bhqd,bhkd->bhqk", q, k) / math.sqrt(D)
    attn = jax.nn.softmax(energy, axis=-1)
    ctx = jnp.einsum("bhqk,bhkd->bhqd", attn, v)
    ctx = ctx.transpose(0, 2, 1, 3).reshape(B, S, E)
    return lin(ctx, params["wo"], params["bo"])


def _init_params(key, emb_dim):
    """Deterministic parameter init (same shapes as nn.Linear: weight (out,in), bias (out,))."""
    keys = jax.random.split(key, 8)
    bound = 1.0 / math.sqrt(emb_dim)

    def u(k, shape):
        return jax.random.uniform(k, shape, jnp.float32, -bound, bound)

    return {
        "wq": u(keys[0], (emb_dim, emb_dim)), "bq": u(keys[1], (emb_dim,)),
        "wk": u(keys[2], (emb_dim, emb_dim)), "bk": u(keys[3], (emb_dim,)),
        "wv": u(keys[4], (emb_dim, emb_dim)), "bv": u(keys[5], (emb_dim,)),
        "wo": u(keys[6], (emb_dim, emb_dim)), "bo": u(keys[7], (emb_dim,)),
    }


if __name__ == "__main__":
    key = jax.random.PRNGKey(0)
    k_param, kq, kk, kv = jax.random.split(key, 4)

    B, S, E = 2, 8, EMB_DIM
    params = _init_params(k_param, E)
    fused = fuse_params(params)  # one-time, outside the hot path
    q_vec = jax.random.normal(kq, (B, S, E), jnp.float32)
    k_vec = jax.random.normal(kk, (B, S, E), jnp.float32)
    v_vec = jax.random.normal(kv, (B, S, E), jnp.float32)

    out = parallel_attention_block(q_vec, k_vec, v_vec, fused)
    out = jax.block_until_ready(out)

    ref = _reference(q_vec, k_vec, v_vec, params)
    assert out.shape == (B, S, E)
    # Slightly looser tolerance than bit-exact f32 because the softmax denominator
    # uses the EUP approximate reciprocal (per performance review).
    assert jnp.allclose(out, ref, atol=2e-3, rtol=2e-3), "mismatch vs reference"

    print("KERNEL_OK")
</pallas_src>

<mosaic_0001>
module attributes {stable_mosaic.version = 11 : i64} {
  func.func @_attention_kernel(%arg0: i32, %arg1: memref<2x8x96xf32, #tpu.memory_space<vmem>>, %arg2: memref<96x96xf32, #tpu.memory_space<vmem>>, %arg3: memref<1x96xf32, #tpu.memory_space<vmem>>, %arg4: memref<32x32xf32, #tpu.memory_space<vmem>>, %arg5: memref<1x32xf32, #tpu.memory_space<vmem>>, %arg6: memref<2x8x32xf32, #tpu.memory_space<vmem>>) attributes {dimension_semantics = [#tpu.dimension_semantics<parallel>], iteration_bounds = array<i64: 1>, scalar_prefetch = 0 : i64, scratch_operands = 0 : i64, tpu.core_type = #tpu.core_type<tc>, window_params = [{transform_indices = @transform_0, window_bounds = array<i64: 2, 8, 96>}, {pipeline_mode = #tpu.pipeline_mode<synchronous>, transform_indices = @transform_1, window_bounds = array<i64: 96, 96>}, {pipeline_mode = #tpu.pipeline_mode<synchronous>, transform_indices = @transform_2, window_bounds = array<i64: 1, 96>}, {pipeline_mode = #tpu.pipeline_mode<synchronous>, transform_indices = @transform_3, window_bounds = array<i64: 32, 32>}, {pipeline_mode = #tpu.pipeline_mode<synchronous>, transform_indices = @transform_4, window_bounds = array<i64: 1, 32>}, {transform_indices = @transform_5, window_bounds = array<i64: 2, 8, 32>}]} {
    %c0 = arith.constant 0 : index
    %c0_0 = arith.constant 0 : index
    %c0_1 = arith.constant 0 : index
    %0 = vector.load %arg1[%c0, %c0_0, %c0_1] : memref<2x8x96xf32, #tpu.memory_space<vmem>>, vector<2x8x96xf32>
    %1 = vector.shape_cast %0 : vector<2x8x96xf32> to vector<16x96xf32>
    %c0_2 = arith.constant 0 : index
    %c0_3 = arith.constant 0 : index
    %2 = vector.load %arg2[%c0_2, %c0_3] : memref<96x96xf32, #tpu.memory_space<vmem>>, vector<96x96xf32>
    %cst = arith.constant dense<0.000000e+00> : vector<16x96xf32>
    %3 = tpu.matmul %1, %2, %cst {dimension_numbers = #tpu.dot_dimension_numbers<[1], [0], [0], [1], [0, 0, 1, 1], [], []>} : vector<16x96xf32>, vector<96x96xf32>, vector<16x96xf32> -> vector<16x96xf32>
    %c0_4 = arith.constant 0 : index
    %c0_5 = arith.constant 0 : index
    %4 = vector.load %arg3[%c0_4, %c0_5] : memref<1x96xf32, #tpu.memory_space<vmem>>, vector<1x96xf32>
    %5 = vector.broadcast %4 : vector<1x96xf32> to vector<16x96xf32>
    %6 = arith.addf %3, %5 : vector<16x96xf32>
    %7 = vector.shape_cast %6 : vector<16x96xf32> to vector<2x8x96xf32>
    %c0_6 = arith.constant 0 : index
    %c0_7 = arith.constant 0 : index
    %8 = vector.load %arg4[%c0_6, %c0_7] : memref<32x32xf32, #tpu.memory_space<vmem>>, vector<32x32xf32>
    %cst_8 = arith.constant 0.000000e+00 : f32
    %9 = vector.broadcast %cst_8 : f32 to vector<16x32xf32>
    %10 = vector.extract_strided_slice %7 {offsets = [0, 0, 0], sizes = [2, 8, 8], strides = [1, 1, 1]} : vector<2x8x96xf32> to vector<2x8x8xf32>
    %11 = vector.extract_strided_slice %7 {offsets = [0, 0, 32], sizes = [2, 8, 8], strides = [1, 1, 1]} : vector<2x8x96xf32> to vector<2x8x8xf32>
    %12 = vector.extract_strided_slice %7 {offsets = [0, 0, 64], sizes = [2, 8, 8], strides = [1, 1, 1]} : vector<2x8x96xf32> to vector<2x8x8xf32>
    "tpu.trace_start"() <{level = 10 : i32, message = "bqd,bkd->bqk"}> : () -> ()
    %cst_9 = arith.constant dense<0.000000e+00> : vector<2x8x8xf32>
    %13 = tpu.matmul %10, %11, %cst_9 {dimension_numbers = #tpu.dot_dimension_numbers<[2], [2], [1], [1], [0, 0, 0, 1, 1, 1], [0], [0]>} : vector<2x8x8xf32>, vector<2x8x8xf32>, vector<2x8x8xf32> -> vector<2x8x8xf32>
    "tpu.trace_stop"() : () -> ()
    %cst_10 = arith.constant 0.353553385 : f32
    %14 = vector.broadcast %cst_10 : f32 to vector<2x8x8xf32>
    %15 = arith.mulf %13, %14 : vector<2x8x8xf32>
    %cst_11 = arith.constant dense<0xFF800000> : vector<2x8xf32>
    %16 = vector.multi_reduction <maximumf>, %15, %cst_11 [2] : vector<2x8x8xf32> to vector<2x8xf32>
    %17 = vector.shape_cast %16 : vector<2x8xf32> to vector<2x8x1xf32>
    %18 = vector.broadcast %17 : vector<2x8x1xf32> to vector<2x8x8xf32>
    %19 = arith.subf %15, %18 : vector<2x8x8xf32>
    %20 = math.exp %19 : vector<2x8x8xf32>
    %cst_12 = arith.constant dense<0.000000e+00> : vector<2x8xf32>
    %21 = vector.multi_reduction <add>, %20, %cst_12 [2] : vector<2x8x8xf32> to vector<2x8xf32>
    %22 = vector.shape_cast %21 : vector<2x8xf32> to vector<2x8x1xf32>
    %23 = tpu.reciprocal %22 {approx = true} : vector<2x8x1xf32> -> vector<2x8x1xf32>
    %24 = vector.broadcast %23 : vector<2x8x1xf32> to vector<2x8x8xf32>
    %25 = arith.mulf %20, %24 : vector<2x8x8xf32>
    "tpu.trace_start"() <{level = 10 : i32, message = "bqk,bkd->bqd"}> : () -> ()
    %cst_13 = arith.constant dense<0.000000e+00> : vector<2x8x8xf32>
    %26 = tpu.matmul %25, %12, %cst_13 {dimension_numbers = #tpu.dot_dimension_numbers<[2], [1], [1], [2], [0, 0, 0, 1, 1, 2], [0], [0]>} : vector<2x8x8xf32>, vector<2x8x8xf32>, vector<2x8x8xf32> -> vector<2x8x8xf32>
    "tpu.trace_stop"() : () -> ()
    %27 = vector.shape_cast %26 : vector<2x8x8xf32> to vector<16x8xf32>
    %28 = vector.extract_strided_slice %8 {offsets = [0, 0], sizes = [8, 32], strides = [1, 1]} : vector<32x32xf32> to vector<8x32xf32>
    %cst_14 = arith.constant dense<0.000000e+00> : vector<16x32xf32>
    %29 = tpu.matmul %27, %28, %cst_14 {dimension_numbers = #tpu.dot_dimension_numbers<[1], [0], [0], [1], [0, 0, 1, 1], [], []>} : vector<16x8xf32>, vector<8x32xf32>, vector<16x32xf32> -> vector<16x32xf32>
    %30 = arith.addf %9, %29 : vector<16x32xf32>
    %31 = vector.extract_strided_slice %7 {offsets = [0, 0, 8], sizes = [2, 8, 8], strides = [1, 1, 1]} : vector<2x8x96xf32> to vector<2x8x8xf32>
    %32 = vector.extract_strided_slice %7 {offsets = [0, 0, 40], sizes = [2, 8, 8], strides = [1, 1, 1]} : vector<2x8x96xf32> to vector<2x8x8xf32>
    %33 = vector.extract_strided_slice %7 {offsets = [0, 0, 72], sizes = [2, 8, 8], strides = [1, 1, 1]} : vector<2x8x96xf32> to vector<2x8x8xf32>
    "tpu.trace_start"() <{level = 10 : i32, message = "bqd,bkd->bqk"}> : () -> ()
    %cst_15 = arith.constant dense<0.000000e+00> : vector<2x8x8xf32>
    %34 = tpu.matmul %31, %32, %cst_15 {dimension_numbers = #tpu.dot_dimension_numbers<[2], [2], [1], [1], [0, 0, 0, 1, 1, 1], [0], [0]>} : vector<2x8x8xf32>, vector<2x8x8xf32>, vector<2x8x8xf32> -> vector<2x8x8xf32>
    "tpu.trace_stop"() : () -> ()
    %cst_16 = arith.constant 0.353553385 : f32
    %35 = vector.broadcast %cst_16 : f32 to vector<2x8x8xf32>
    %36 = arith.mulf %34, %35 : vector<2x8x8xf32>
    %cst_17 = arith.constant dense<0xFF800000> : vector<2x8xf32>
    %37 = vector.multi_reduction <maximumf>, %36, %cst_17 [2] : vector<2x8x8xf32> to vector<2x8xf32>
    %38 = vector.shape_cast %37 : vector<2x8xf32> to vector<2x8x1xf32>
    %39 = vector.broadcast %38 : vector<2x8x1xf32> to vector<2x8x8xf32>
    %40 = arith.subf %36, %39 : vector<2x8x8xf32>
    %41 = math.exp %40 : vector<2x8x8xf32>
    %cst_18 = arith.constant dense<0.000000e+00> : vector<2x8xf32>
    %42 = vector.multi_reduction <add>, %41, %cst_18 [2] : vector<2x8x8xf32> to vector<2x8xf32>
    %43 = vector.shape_cast %42 : vector<2x8xf32> to vector<2x8x1xf32>
    %44 = tpu.reciprocal %43 {approx = true} : vector<2x8x1xf32> -> vector<2x8x1xf32>
    %45 = vector.broadcast %44 : vector<2x8x1xf32> to vector<2x8x8xf32>
    %46 = arith.mulf %41, %45 : vector<2x8x8xf32>
    "tpu.trace_start"() <{level = 10 : i32, message = "bqk,bkd->bqd"}> : () -> ()
    %cst_19 = arith.constant dense<0.000000e+00> : vector<2x8x8xf32>
    %47 = tpu.matmul %46, %33, %cst_19 {dimension_numbers = #tpu.dot_dimension_numbers<[2], [1], [1], [2], [0, 0, 0, 1, 1, 2], [0], [0]>} : vector<2x8x8xf32>, vector<2x8x8xf32>, vector<2x8x8xf32> -> vector<2x8x8xf32>
    "tpu.trace_stop"() : () -> ()
    %48 = vector.shape_cast %47 : vector<2x8x8xf32> to vector<16x8xf32>
    %49 = vector.extract_strided_slice %8 {offsets = [8, 0], sizes = [8, 32], strides = [1, 1]} : vector<32x32xf32> to vector<8x32xf32>
    %cst_20 = arith.constant dense<0.000000e+00> : vector<16x32xf32>
    %50 = tpu.matmul %48, %49, %cst_20 {dimension_numbers = #tpu.dot_dimension_numbers<[1], [0], [0], [1], [0, 0, 1, 1], [], []>} : vector<16x8xf32>, vector<8x32xf32>, vector<16x32xf32> -> vector<16x32xf32>
    %51 = arith.addf %30, %50 : vector<16x32xf32>
    %52 = vector.extract_strided_slice %7 {offsets = [0, 0, 16], sizes = [2, 8, 8], strides = [1, 1, 1]} : vector<2x8x96xf32> to vector<2x8x8xf32>
    %53 = vector.extract_strided_slice %7 {offsets = [0, 0, 48], sizes = [2, 8, 8], strides = [1, 1, 1]} : vector<2x8x96xf32> to vector<2x8x8xf32>
    %54 = vector.extract_strided_slice %7 {offsets = [0, 0, 80], sizes = [2, 8, 8], strides = [1, 1, 1]} : vector<2x8x96xf32> to vector<2x8x8xf32>
    "tpu.trace_start"() <{level = 10 : i32, message = "bqd,bkd->bqk"}> : () -> ()
    %cst_21 = arith.constant dense<0.000000e+00> : vector<2x8x8xf32>
    %55 = tpu.matmul %52, %53, %cst_21 {dimension_numbers = #tpu.dot_dimension_numbers<[2], [2], [1], [1], [0, 0, 0, 1, 1, 1], [0], [0]>} : vector<2x8x8xf32>, vector<2x8x8xf32>, vector<2x8x8xf32> -> vector<2x8x8xf32>
    "tpu.trace_stop"() : () -> ()
    %cst_22 = arith.constant 0.353553385 : f32
    %56 = vector.broadcast %cst_22 : f32 to vector<2x8x8xf32>
    %57 = arith.mulf %55, %56 : vector<2x8x8xf32>
    %cst_23 = arith.constant dense<0xFF800000> : vector<2x8xf32>
    %58 = vector.multi_reduction <maximumf>, %57, %cst_23 [2] : vector<2x8x8xf32> to vector<2x8xf32>
    %59 = vector.shape_cast %58 : vector<2x8xf32> to vector<2x8x1xf32>
    %60 = vector.broadcast %59 : vector<2x8x1xf32> to vector<2x8x8xf32>
    %61 = arith.subf %57, %60 : vector<2x8x8xf32>
    %62 = math.exp %61 : vector<2x8x8xf32>
    %cst_24 = arith.constant dense<0.000000e+00> : vector<2x8xf32>
    %63 = vector.multi_reduction <add>, %62, %cst_24 [2] : vector<2x8x8xf32> to vector<2x8xf32>
    %64 = vector.shape_cast %63 : vector<2x8xf32> to vector<2x8x1xf32>
    %65 = tpu.reciprocal %64 {approx = true} : vector<2x8x1xf32> -> vector<2x8x1xf32>
    %66 = vector.broadcast %65 : vector<2x8x1xf32> to vector<2x8x8xf32>
    %67 = arith.mulf %62, %66 : vector<2x8x8xf32>
    "tpu.trace_start"() <{level = 10 : i32, message = "bqk,bkd->bqd"}> : () -> ()
    %cst_25 = arith.constant dense<0.000000e+00> : vector<2x8x8xf32>
    %68 = tpu.matmul %67, %54, %cst_25 {dimension_numbers = #tpu.dot_dimension_numbers<[2], [1], [1], [2], [0, 0, 0, 1, 1, 2], [0], [0]>} : vector<2x8x8xf32>, vector<2x8x8xf32>, vector<2x8x8xf32> -> vector<2x8x8xf32>
    "tpu.trace_stop"() : () -> ()
    %69 = vector.shape_cast %68 : vector<2x8x8xf32> to vector<16x8xf32>
    %70 = vector.extract_strided_slice %8 {offsets = [16, 0], sizes = [8, 32], strides = [1, 1]} : vector<32x32xf32> to vector<8x32xf32>
    %cst_26 = arith.constant dense<0.000000e+00> : vector<16x32xf32>
    %71 = tpu.matmul %69, %70, %cst_26 {dimension_numbers = #tpu.dot_dimension_numbers<[1], [0], [0], [1], [0, 0, 1, 1], [], []>} : vector<16x8xf32>, vector<8x32xf32>, vector<16x32xf32> -> vector<16x32xf32>
    %72 = arith.addf %51, %71 : vector<16x32xf32>
    %73 = vector.extract_strided_slice %7 {offsets = [0, 0, 24], sizes = [2, 8, 8], strides = [1, 1, 1]} : vector<2x8x96xf32> to vector<2x8x8xf32>
    %74 = vector.extract_strided_slice %7 {offsets = [0, 0, 56], sizes = [2, 8, 8], strides = [1, 1, 1]} : vector<2x8x96xf32> to vector<2x8x8xf32>
    %75 = vector.extract_strided_slice %7 {offsets = [0, 0, 88], sizes = [2, 8, 8], strides = [1, 1, 1]} : vector<2x8x96xf32> to vector<2x8x8xf32>
    "tpu.trace_start"() <{level = 10 : i32, message = "bqd,bkd->bqk"}> : () -> ()
    %cst_27 = arith.constant dense<0.000000e+00> : vector<2x8x8xf32>
    %76 = tpu.matmul %73, %74, %cst_27 {dimension_numbers = #tpu.dot_dimension_numbers<[2], [2], [1], [1], [0, 0, 0, 1, 1, 1], [0], [0]>} : vector<2x8x8xf32>, vector<2x8x8xf32>, vector<2x8x8xf32> -> vector<2x8x8xf32>
    "tpu.trace_stop"() : () -> ()
    %cst_28 = arith.constant 0.353553385 : f32
    %77 = vector.broadcast %cst_28 : f32 to vector<2x8x8xf32>
    %78 = arith.mulf %76, %77 : vector<2x8x8xf32>
    %cst_29 = arith.constant dense<0xFF800000> : vector<2x8xf32>
    %79 = vector.multi_reduction <maximumf>, %78, %cst_29 [2] : vector<2x8x8xf32> to vector<2x8xf32>
    %80 = vector.shape_cast %79 : vector<2x8xf32> to vector<2x8x1xf32>
    %81 = vector.broadcast %80 : vector<2x8x1xf32> to vector<2x8x8xf32>
    %82 = arith.subf %78, %81 : vector<2x8x8xf32>
    %83 = math.exp %82 : vector<2x8x8xf32>
    %cst_30 = arith.constant dense<0.000000e+00> : vector<2x8xf32>
    %84 = vector.multi_reduction <add>, %83, %cst_30 [2] : vector<2x8x8xf32> to vector<2x8xf32>
    %85 = vector.shape_cast %84 : vector<2x8xf32> to vector<2x8x1xf32>
    %86 = tpu.reciprocal %85 {approx = true} : vector<2x8x1xf32> -> vector<2x8x1xf32>
    %87 = vector.broadcast %86 : vector<2x8x1xf32> to vector<2x8x8xf32>
    %88 = arith.mulf %83, %87 : vector<2x8x8xf32>
    "tpu.trace_start"() <{level = 10 : i32, message = "bqk,bkd->bqd"}> : () -> ()
    %cst_31 = arith.constant dense<0.000000e+00> : vector<2x8x8xf32>
    %89 = tpu.matmul %88, %75, %cst_31 {dimension_numbers = #tpu.dot_dimension_numbers<[2], [1], [1], [2], [0, 0, 0, 1, 1, 2], [0], [0]>} : vector<2x8x8xf32>, vector<2x8x8xf32>, vector<2x8x8xf32> -> vector<2x8x8xf32>
    "tpu.trace_stop"() : () -> ()
    %90 = vector.shape_cast %89 : vector<2x8x8xf32> to vector<16x8xf32>
    %91 = vector.extract_strided_slice %8 {offsets = [24, 0], sizes = [8, 32], strides = [1, 1]} : vector<32x32xf32> to vector<8x32xf32>
    %cst_32 = arith.constant dense<0.000000e+00> : vector<16x32xf32>
    %92 = tpu.matmul %90, %91, %cst_32 {dimension_numbers = #tpu.dot_dimension_numbers<[1], [0], [0], [1], [0, 0, 1, 1], [], []>} : vector<16x8xf32>, vector<8x32xf32>, vector<16x32xf32> -> vector<16x32xf32>
    %93 = arith.addf %72, %92 : vector<16x32xf32>
    %c0_33 = arith.constant 0 : index
    %c0_34 = arith.constant 0 : index
    %94 = vector.load %arg5[%c0_33, %c0_34] : memref<1x32xf32, #tpu.memory_space<vmem>>, vector<1x32xf32>
    %95 = vector.broadcast %94 : vector<1x32xf32> to vector<16x32xf32>
    %96 = arith.addf %93, %95 : vector<16x32xf32>
    %97 = vector.shape_cast %96 : vector<16x32xf32> to vector<2x8x32xf32>
    %c0_35 = arith.constant 0 : index
    %c0_36 = arith.constant 0 : index
    %c0_37 = arith.constant 0 : index
    %98 = vector.load %arg6[%c0_35, %c0_36, %c0_37] : memref<2x8x32xf32, #tpu.memory_space<vmem>>, vector<2x8x32xf32>
    tpu.vector_store %arg6[%c0_35, %c0_36, %c0_37], %97 {strides = array<i32>} : memref<2x8x32xf32, #tpu.memory_space<vmem>>, vector<2x8x32xf32>,
    return
  }
  func.func @transform_0(%arg0: i32) -> (i32, i32, i32) {
    %c0_i32 = arith.constant 0 : i32
    %c0_i32_0 = arith.constant 0 : i32
    %c0_i32_1 = arith.constant 0 : i32
    return %arg0, %c0_i32, %c0_i32_0 : i32, i32, i32
  }
  func.func @transform_1(%arg0: i32) -> (i32, i32) {
    %c0_i32 = arith.constant 0 : i32
    %c0_i32_0 = arith.constant 0 : i32
    %c0_i32_1 = arith.constant 0 : i32
    return %c0_i32, %c0_i32_0 : i32, i32
  }
  func.func @transform_2(%arg0: i32) -> (i32, i32) {
    %c0_i32 = arith.constant 0 : i32
    %c0_i32_0 = arith.constant 0 : i32
    %c0_i32_1 = arith.constant 0 : i32
    return %c0_i32, %c0_i32_0 : i32, i32
  }
  func.func @transform_3(%arg0: i32) -> (i32, i32) {
    %c0_i32 = arith.constant 0 : i32
    %c0_i32_0 = arith.constant 0 : i32
    %c0_i32_1 = arith.constant 0 : i32
    return %c0_i32, %c0_i32_0 : i32, i32
  }
  func.func @transform_4(%arg0: i32) -> (i32, i32) {
    %c0_i32 = arith.constant 0 : i32
    %c0_i32_0 = arith.constant 0 : i32
    %c0_i32_1 = arith.constant 0 : i32
    return %c0_i32, %c0_i32_0 : i32, i32
  }
  func.func @transform_5(%arg0: i32) -> (i32, i32, i32) {
    %c0_i32 = arith.constant 0 : i32
    %c0_i32_0 = arith.constant 0 : i32
    %c0_i32_1 = arith.constant 0 : i32
    return %arg0, %c0_i32, %c0_i32_0 : i32, i32, i32
  }
}

</mosaic_0001>

<llo_original>
// kernel: parallel_attention_block.1
$region0: #{parallel_attention_block.1}
  #allocation0 [shape = 'u32[]', space=smem, size = 0x4, offset = 0x4, fixed_abs, tag = 'smem constant byte address 0x4 - core index']
  #allocation1 [shape = 'u32[144,128]{1,0:T(1,128)}', space=vmem, size = 0x12000, scoped, tag = 'internal scratch']
  %s0 = inlined_call_operand.vmem [shape: f32[2,8,96], index: 0, kind: input, shape index: {}]
  %s1 = inlined_call_operand.hbm [shape: f32[96,96], index: 1, kind: input, shape index: {}]
  %s2 = inlined_call_operand.vmem [shape: f32[1,96], index: 2, kind: input, shape index: {}]
  %s3 = inlined_call_operand.vmem [shape: f32[32,32], index: 3, kind: input, shape index: {}]
  %s4 = inlined_call_operand.vmem [shape: f32[1,32], index: 4, kind: input, shape index: {}]
  %s5 = inlined_call_operand.hbm [shape: f32[2,8,32], index: 5, kind: output, shape index: {}]
  %s6 = sld [smem:[#allocation0]]
  $region34: #{parallel_attention_block.1} parent=0
    _
  %s8 = ssub.s32 1, %s6
  %s9 = scalar_select 0, %s8, %s6
  $region1: #{parallel_attention_block.1} parent=0
    #allocation2 [shape = 'u8[49152]{0}', space=vmem, size = 0xc000, scoped, tag = 'input window, operand 1, single buffered']
    #allocation3 [shape = 's32[1]{0}', space=sflag, size = 0x4, scoped, tag = 'scoped memory for parallel_attention_block.1']
    #allocation4 [shape = 's32[1]{0}', space=sflag, size = 0x4, scoped, tag = 'scoped memory for parallel_attention_block.1']
    #allocation5 [shape = 'u8[8192]{0}', space=vmem, size = 0x2000, scoped, tag = 'output window, operand 0, single buffered']
    %10 = vsyncpa [#allocation3], 0
    %11 = vsyncpa [#allocation4], 0
    // Predicated region
    $region2: #{parallel_attention_block.1} parent=1 // pred_check
      _
    $region3: #{parallel_attention_block.1} parent=1 // pred_check_branch
      %13 = sbr.rel (0) target = $region5
    $region4: #{parallel_attention_block.1} parent=1 // pred_region
      _
    $region5: #{parallel_attention_block.1} parent=1 // pred_fallthru
      _
    // Predicated region
    $region6: #{parallel_attention_block.1} parent=1 // pred_check
      _
    $region7: #{parallel_attention_block.1} parent=1 // pred_check_branch
      %15 = sbr.rel (0) target = $region9
    $region8: #{parallel_attention_block.1} parent=1 // pred_region
      %s17 = ssub.s32 1536, 1536
      %18 = vsyncadd [#allocation3], %s17
      %s19 = sshll.u32 [#allocation2], 4
      %s20 = int_to_ptr.vmem [resolvable:$true] %s19
      %25 = dma.hbm_to_vmem [thread:$0]  %s1, 1536, %s20, [#allocation3], 128, 128, 8
    $region9: #{parallel_attention_block.1} parent=1 // pred_fallthru
      _
    // Predicated region
    $region10: #{parallel_attention_block.1} parent=1 // pred_check
      _
    $region11: #{parallel_attention_block.1} parent=1 // pred_check_branch
      %27 = sbr.rel (0) target = $region13
    $region12: #{parallel_attention_block.1} parent=1 // pred_region
      _
    $region13: #{parallel_attention_block.1} parent=1 // pred_fallthru
      _
    // Predicated region
    $region14: #{parallel_attention_block.1} parent=1 // pred_check
      _
    $region15: #{parallel_attention_block.1} parent=1 // pred_check_branch
      %29 = sbr.rel (0) target = $region17
    $region16: #{parallel_attention_block.1} parent=1 // pred_region
      _
    $region17: #{parallel_attention_block.1} parent=1 // pred_fallthru
      _
    // Predicated region
    $region18: #{parallel_attention_block.1} parent=1 // pred_check
      _
    $region19: #{parallel_attention_block.1} parent=1 // pred_check_branch
      %31 = sbr.rel (0) target = $region21
    $region20: #{parallel_attention_block.1} parent=1 // pred_region
      _
    $region21: #{parallel_attention_block.1} parent=1 // pred_fallthru
      _
    // Predicated region
    $region22: #{parallel_attention_block.1} parent=1 // pred_check
      _
    $region23: #{parallel_attention_block.1} parent=1 // pred_check_branch
      %33 = sbr.rel (0) target = $region25
    $region24: #{parallel_attention_block.1} parent=1 // pred_region
      %34 = dma.done [#allocation3], 1536
    $region25: #{parallel_attention_block.1} parent=1 // pred_fallthru
      _
    %v35 = vld [vmem:[%s0] sm:$0xff]
    %v36 = vld [vmem:[%s0 + $0x8] sm:$0xff]
    %v37 = vld [vmem:[#allocation2] sm:$0xff]
    %v38 = vld [vmem:[#allocation2 + $0x8] sm:$0xff]
    %v39 = vld [vmem:[#allocation2 + $0x10] sm:$0xff]
    %v40 = vld [vmem:[#allocation2 + $0x18] sm:$0xff]
    %v41 = vld [vmem:[#allocation2 + $0x20] sm:$0xff]
    %v42 = vld [vmem:[#allocation2 + $0x28] sm:$0xff]
    %v43 = vld [vmem:[#allocation2 + $0x30] sm:$0xff]
    %v44 = vld [vmem:[#allocation2 + $0x38] sm:$0xff]
    %v45 = vld [vmem:[#allocation2 + $0x40] sm:$0xff]
    %v46 = vld [vmem:[#allocation2 + $0x48] sm:$0xff]
    %v47 = vld [vmem:[#allocation2 + $0x50] sm:$0xff]
    %v48 = vld [vmem:[#allocation2 + $0x58] sm:$0xff]
    %v49 = vld [vmem:[%s2] sm:$0x1]
    %v51 = vlaneseq
    %v52 = vshrl.u32 %v51, 7
    %v53 = vsub.s32 0, %v52
    %v54 = vrot.slane %v49, %v53
    %vm56 = vcmask 785408
    %v58 = vsel %vm56, %v35, 0
    %v61 = vsel %vm56, %v36, 0
    %63 = vmatprep.subr.mxu0 0.0
    %64 = vmatpush1.msra.mxu0 %v37
    %65 = vmatprep.subr.mxu0 0.0
    %66 = vmatpush1.msra.mxu0 %v38
    %67 = vmatprep.subr.mxu0 0.0
    %68 = vmatpush1.msra.mxu0 %v39
    %69 = vmatprep.subr.mxu0 0.0
    %70 = vmatpush1.msra.mxu0 %v40
    %71 = vmatprep.subr.mxu0 0.0
    %72 = vmatpush1.msra.mxu0 %v41
    %73 = vmatprep.subr.mxu0 0.0
    %74 = vmatpush1.msra.mxu0 %v42
    %75 = vmatprep.subr.mxu0 0.0
    %76 = vmatpush1.msra.mxu0 %v43
    %77 = vmatprep.subr.mxu0 0.0
    %78 = vmatpush1.msra.mxu0 %v44
    %79 = vmatprep.subr.mxu0 0.0
    %80 = vmatpush1.msra.mxu0 %v45
    %81 = vmatprep.subr.mxu0 0.0
    %82 = vmatpush1.msra.mxu0 %v46
    %83 = vmatprep.subr.mxu0 0.0
    %84 = vmatpush1.msra.mxu0 %v47
    %85 = vmatprep.subr.mxu0 0.0
    %86 = vmatpush1.msra.mxu0 %v48
    %87 = vmatprep.subr.mxu0 0.0
    %88 = vmatpush1.msra.mxu0 0.0
    %89 = vmatprep.subr.mxu0 0.0
    %90 = vmatpush1.msra.mxu0 0.0
    %91 = vmatprep.subr.mxu0 0.0
    %92 = vmatpush1.msra.mxu0 0.0
    %93 = vmatprep.subr.mxu0 0.0
    %94 = vmatpush1.msra.mxu0 0.0
    %95 = vmatprep.subr.mxu0 0.0
    %96 = vmatpush1.msra.mxu0 0.0
    %97 = vmatprep.subr.mxu0 0.0
    %98 = vmatpush1.msra.mxu0 0.0
    %99 = vmatprep.subr.mxu0 0.0
    %100 = vmatpush1.msra.mxu0 0.0
    %101 = vmatprep.subr.mxu0 0.0
    %102 = vmatpush1.msra.mxu0 0.0
    %103 = vmatprep.subr.mxu0 0.0
    %104 = vmatpush1.msra.mxu0 0.0
    %105 = vmatprep.subr.mxu0 0.0
    %106 = vmatpush1.msra.mxu0 0.0
    %107 = vmatprep.subr.mxu0 0.0
    %108 = vmatpush1.msra.mxu0 0.0
    %109 = vmatprep.subr.mxu0 0.0
    %110 = vmatpush1.msra.mxu0 0.0
    %111 = vmatprep.subr.mxu0 0.0
    %112 = vmatpush1.msra.mxu0 0.0
    %113 = vmatprep.subr.mxu0 0.0
    %114 = vmatpush1.msra.mxu0 0.0
    %115 = vmatprep.subr.mxu0 0.0
    %116 = vmatpush1.msra.mxu0 0.0
    %117 = vmatprep.subr.mxu0 0.0
    %118 = vmatpush1.msra.mxu0 0.0
    %119 = vmatprep.subr.mxu0 0.0
    %120 = vmatpush1.msra.mxu0 0.0
    %121 = vmatprep.subr.mxu0 0.0
    %122 = vmatpush1.msra.mxu0 0.0
    %123 = vmatprep.subr.mxu0 0.0
    %124 = vmatpush1.msra.mxu0 0.0
    %125 = vmatprep.subr.mxu0 0.0
    %126 = vmatpush1.msra.mxu0 0.0
    %127 = vmatprep.mubr.f32.mxu0 0.0
    %128 = vmatmul.mubr.f32.gmra.mrb[0].mxu0 %v58
    %v129 = vpop.f32.mrb[0].mxu0
    %v130 = vadd.f32 %v54, %v129
    %v131 = vpop.f32.mrb[0].mxu0
    %132 = vmatprep.mubr.f32.mxu0 0.0
    %133 = vmatmul.mubr.f32.gmra.mrb[0].mxu0 %v61
    %v134 = vpop.f32.mrb[0].mxu0
    %v135 = vadd.f32 %v54, %v134
    %v136 = vpop.f32.mrb[0].mxu0
    %137 = vdwg.mxu0
    %v138 = vld [vmem:[%s3] sm:$0xff]
    %v139 = vld [vmem:[%s3 + $0x8] sm:$0xff]
    %v140 = vld [vmem:[%s3 + $0x10] sm:$0xff]
    %v141 = vld [vmem:[%s3 + $0x18] sm:$0xff]
    %143 = vrot.lane.b32.xlu0 %v130, 96
    %v144 = vpop.permute.xlu0 %143
    %vm145 = vcmask 64512
    %v146 = vsel %vm145, %v130, 0
    %v148 = vsel %vm145, %v144, 0
    %150 = vmatprep.subr.mxu0 0.0
    %151 = vmatpush1.xpose.msra.mxu0 %v148
    %152 = vmatprep.subr.mxu0 0.0
    %153 = vmatpush1.xpose.msra.mxu0 0.0
    %154 = vmatprep.subr.mxu0 0.0
    %155 = vmatpush1.xpose.msra.mxu0 0.0
    %156 = vmatprep.subr.mxu0 0.0
    %157 = vmatpush1.xpose.msra.mxu0 0.0
    %158 = vmatprep.subr.mxu0 0.0
    %159 = vmatpush1.xpose.msra.mxu0 0.0
    %160 = vmatprep.subr.mxu0 0.0
    %161 = vmatpush1.xpose.msra.mxu0 0.0
    %162 = vmatprep.subr.mxu0 0.0
    %163 = vmatpush1.xpose.msra.mxu0 0.0
    %164 = vmatprep.subr.mxu0 0.0
    %165 = vmatpush1.xpose.msra.mxu0 0.0
    %166 = vmatprep.subr.mxu0 0.0
    %167 = vmatpush1.xpose.msra.mxu0 0.0
    %168 = vmatprep.subr.mxu0 0.0
    %169 = vmatpush1.xpose.msra.mxu0 0.0
    %170 = vmatprep.subr.mxu0 0.0
    %171 = vmatpush1.xpose.msra.mxu0 0.0
    %172 = vmatprep.subr.mxu0 0.0
    %173 = vmatpush1.xpose.msra.mxu0 0.0
    %174 = vmatprep.subr.mxu0 0.0
    %175 = vmatpush1.xpose.msra.mxu0 0.0
    %176 = vmatprep.subr.mxu0 0.0
    %177 = vmatpush1.xpose.msra.mxu0 0.0
    %178 = vmatprep.subr.mxu0 0.0
    %179 = vmatpush1.xpose.msra.mxu0 0.0
    %180 = vmatprep.subr.mxu0 0.0
    %181 = vmatpush1.xpose.msra.mxu0 0.0
    %182 = vmatprep.subr.mxu0 0.0
    %183 = vmatpush1.xpose.msra.mxu0 0.0
    %184 = vmatprep.subr.mxu0 0.0
    %185 = vmatpush1.xpose.msra.mxu0 0.0
    %186 = vmatprep.subr.mxu0 0.0
    %187 = vmatpush1.xpose.msra.mxu0 0.0
    %188 = vmatprep.subr.mxu0 0.0
    %189 = vmatpush1.xpose.msra.mxu0 0.0
    %190 = vmatprep.subr.mxu0 0.0
    %191 = vmatpush1.xpose.msra.mxu0 0.0
    %192 = vmatprep.subr.mxu0 0.0
    %193 = vmatpush1.xpose.msra.mxu0 0.0
    %194 = vmatprep.subr.mxu0 0.0
    %195 = vmatpush1.xpose.msra.mxu0 0.0
    %196 = vmatprep.subr.mxu0 0.0
    %197 = vmatpush1.xpose.msra.mxu0 0.0
    %198 = vmatprep.subr.mxu0 0.0
    %199 = vmatpush1.xpose.msra.mxu0 0.0
    %200 = vmatprep.subr.mxu0 0.0
    %201 = vmatpush1.xpose.msra.mxu0 0.0
    %202 = vmatprep.subr.mxu0 0.0
    %203 = vmatpush1.xpose.msra.mxu0 0.0
    %204 = vmatprep.subr.mxu0 0.0
    %205 = vmatpush1.xpose.msra.mxu0 0.0
    %206 = vmatprep.subr.mxu0 0.0
    %207 = vmatpush1.xpose.msra.mxu0 0.0
    %208 = vmatprep.subr.mxu0 0.0
    %209 = vmatpush1.xpose.msra.mxu0 0.0
    %210 = vmatprep.subr.mxu0 0.0
    %211 = vmatpush1.xpose.msra.mxu0 0.0
    %212 = vmatprep.subr.mxu0 0.0
    %213 = vmatpush1.xpose.msra.mxu0 0.0
    %214 = vmatprep.mubr.f32.mxu0 0.0
    %215 = vmatmul.mubr.f32.gmra.mrb[0].mxu0 %v146
    %v216 = vpop.f32.mrb[0].mxu0
    %v217 = vadd.f32 0.0, %v216
    %v218 = vpop.f32.mrb[0].mxu0
    %219 = vdwg.mxu0
    %221 = vrot.lane.b32.xlu0 %v135, 96
    %v222 = vpop.permute.xlu0 %221
    %v223 = vsel %vm145, %v135, 0
    %v225 = vsel %vm145, %v222, 0
    %227 = vmatprep.subr.mxu0 0.0
    %228 = vmatpush1.xpose.msra.mxu0 %v225
    %229 = vmatprep.subr.mxu0 0.0
    %230 = vmatpush1.xpose.msra.mxu0 0.0
    %231 = vmatprep.subr.mxu0 0.0
    %232 = vmatpush1.xpose.msra.mxu0 0.0
    %233 = vmatprep.subr.mxu0 0.0
    %234 = vmatpush1.xpose.msra.mxu0 0.0
    %235 = vmatprep.subr.mxu0 0.0
    %236 = vmatpush1.xpose.msra.mxu0 0.0
    %237 = vmatprep.subr.mxu0 0.0
    %238 = vmatpush1.xpose.msra.mxu0 0.0
    %239 = vmatprep.subr.mxu0 0.0
    %240 = vmatpush1.xpose.msra.mxu0 0.0
    %241 = vmatprep.subr.mxu0 0.0
    %242 = vmatpush1.xpose.msra.mxu0 0.0
    %243 = vmatprep.subr.mxu0 0.0
    %244 = vmatpush1.xpose.msra.mxu0 0.0
    %245 = vmatprep.subr.mxu0 0.0
    %246 = vmatpush1.xpose.msra.mxu0 0.0
    %247 = vmatprep.subr.mxu0 0.0
    %248 = vmatpush1.xpose.msra.mxu0 0.0
    %249 = vmatprep.subr.mxu0 0.0
    %250 = vmatpush1.xpose.msra.mxu0 0.0
    %251 = vmatprep.subr.mxu0 0.0
    %252 = vmatpush1.xpose.msra.mxu0 0.0
    %253 = vmatprep.subr.mxu0 0.0
    %254 = vmatpush1.xpose.msra.mxu0 0.0
    %255 = vmatprep.subr.mxu0 0.0
    %256 = vmatpush1.xpose.msra.mxu0 0.0
    %257 = vmatprep.subr.mxu0 0.0
    %258 = vmatpush1.xpose.msra.mxu0 0.0
    %259 = vmatprep.subr.mxu0 0.0
    %260 = vmatpush1.xpose.msra.mxu0 0.0
    %261 = vmatprep.subr.mxu0 0.0
    %262 = vmatpush1.xpose.msra.mxu0 0.0
    %263 = vmatprep.subr.mxu0 0.0
    %264 = vmatpush1.xpose.msra.mxu0 0.0
    %265 = vmatprep.subr.mxu0 0.0
    %266 = vmatpush1.xpose.msra.mxu0 0.0
    %267 = vmatprep.subr.mxu0 0.0
    %268 = vmatpush1.xpose.msra.mxu0 0.0
    %269 = vmatprep.subr.mxu0 0.0
    %270 = vmatpush1.xpose.msra.mxu0 0.0
    %271 = vmatprep.subr.mxu0 0.0
    %272 = vmatpush1.xpose.msra.mxu0 0.0
    %273 = vmatprep.subr.mxu0 0.0
    %274 = vmatpush1.xpose.msra.mxu0 0.0
    %275 = vmatprep.subr.mxu0 0.0
    %276 = vmatpush1.xpose.msra.mxu0 0.0
    %277 = vmatprep.subr.mxu0 0.0
    %278 = vmatpush1.xpose.msra.mxu0 0.0
    %279 = vmatprep.subr.mxu0 0.0
    %280 = vmatpush1.xpose.msra.mxu0 0.0
    %281 = vmatprep.subr.mxu0 0.0
    %282 = vmatpush1.xpose.msra.mxu0 0.0
    %283 = vmatprep.subr.mxu0 0.0
    %284 = vmatpush1.xpose.msra.mxu0 0.0
    %285 = vmatprep.subr.mxu0 0.0
    %286 = vmatpush1.xpose.msra.mxu0 0.0
    %287 = vmatprep.subr.mxu0 0.0
    %288 = vmatpush1.xpose.msra.mxu0 0.0
    %289 = vmatprep.subr.mxu0 0.0
    %290 = vmatpush1.xpose.msra.mxu0 0.0
    %291 = vmatprep.mubr.f32.mxu0 0.0
    %292 = vmatmul.mubr.f32.gmra.mrb[0].mxu0 %v223
    %v293 = vpop.f32.mrb[0].mxu0
    %v294 = vadd.f32 0.0, %v293
    %v295 = vpop.f32.mrb[0].mxu0
    %296 = vdwg.mxu0
    %v297 = vmul.f32 %v217, 0.35355338
    %v298 = vmul.f32 %v294, 0.35355338
    %v299 = vsel %vm145, %v297, -inf
    %300 = vmax.xlane.f32.xlu0 %v299
    %v301 = vpop.xlane.xlu0 %300
    %v302 = vsel %vm145, %v298, -inf
    %303 = vmax.xlane.f32.xlu0 %v302
    %v304 = vpop.xlane.xlu0 %303
    %v305 = vsub.f32 %v297, %v301
    %v306 = vsub.f32 %v298, %v304
    %v307 = vmul.f32 %v305, 1.442695
    %v308 = vpow.pop %v307
    %v309 = vmul.f32 %v306, 1.442695
    %v310 = vpow.pop %v309
    %v311 = vsel %vm145, %v308, 0.0
    %312 = vadd.xlane.f32.xlu0 %v311
    %v313 = vpop.xlane.xlu0 %312
    %v314 = vsel %vm145, %v310, 0.0
    %315 = vadd.xlane.f32.xlu0 %v314
    %v316 = vpop.xlane.xlu0 %315
    %v317 = vrcp.pop %v313
    %v318 = vrcp.pop %v316
    %v319 = vmul.f32 %v308, %v317
    %v320 = vmul.f32 %v310, %v318
    %321 = vrot.lane.b32.xlu0 %v130, 64
    %v322 = vpop.permute.xlu0 %321
    %v325 = vsel %vm145, %v319, 0
    %327 = vmatprep.subr.mxu0 0.0
    %328 = vmatpush1.msra.mxu0 %v322
    %329 = vmatprep.subr.mxu0 0.0
    %330 = vmatpush1.msra.mxu0 0.0
    %331 = vmatprep.subr.mxu0 0.0
    %332 = vmatpush1.msra.mxu0 0.0
    %333 = vmatprep.subr.mxu0 0.0
    %334 = vmatpush1.msra.mxu0 0.0
    %335 = vmatprep.subr.mxu0 0.0
    %336 = vmatpush1.msra.mxu0 0.0
    %337 = vmatprep.subr.mxu0 0.0
    %338 = vmatpush1.msra.mxu0 0.0
    %339 = vmatprep.subr.mxu0 0.0
    %340 = vmatpush1.msra.mxu0 0.0
    %341 = vmatprep.subr.mxu0 0.0
    %342 = vmatpush1.msra.mxu0 0.0
    %343 = vmatprep.subr.mxu0 0.0
    %344 = vmatpush1.msra.mxu0 0.0
    %345 = vmatprep.subr.mxu0 0.0
    %346 = vmatpush1.msra.mxu0 0.0
    %347 = vmatprep.subr.mxu0 0.0
    %348 = vmatpush1.msra.mxu0 0.0
    %349 = vmatprep.subr.mxu0 0.0
    %350 = vmatpush1.msra.mxu0 0.0
    %351 = vmatprep.subr.mxu0 0.0
    %352 = vmatpush1.msra.mxu0 0.0
    %353 = vmatprep.subr.mxu0 0.0
    %354 = vmatpush1.msra.mxu0 0.0
    %355 = vmatprep.subr.mxu0 0.0
    %356 = vmatpush1.msra.mxu0 0.0
    %357 = vmatprep.subr.mxu0 0.0
    %358 = vmatpush1.msra.mxu0 0.0
    %359 = vmatprep.subr.mxu0 0.0
    %360 = vmatpush1.msra.mxu0 0.0
    %361 = vmatprep.subr.mxu0 0.0
    %362 = vmatpush1.msra.mxu0 0.0
    %363 = vmatprep.subr.mxu0 0.0
    %364 = vmatpush1.msra.mxu0 0.0
    %365 = vmatprep.subr.mxu0 0.0
    %366 = vmatpush1.msra.mxu0 0.0
    %367 = vmatprep.subr.mxu0 0.0
    %368 = vmatpush1.msra.mxu0 0.0
    %369 = vmatprep.subr.mxu0 0.0
    %370 = vmatpush1.msra.mxu0 0.0
    %371 = vmatprep.subr.mxu0 0.0
    %372 = vmatpush1.msra.mxu0 0.0
    %373 = vmatprep.subr.mxu0 0.0
    %374 = vmatpush1.msra.mxu0 0.0
    %375 = vmatprep.subr.mxu0 0.0
    %376 = vmatpush1.msra.mxu0 0.0
    %377 = vmatprep.subr.mxu0 0.0
    %378 = vmatpush1.msra.mxu0 0.0
    %379 = vmatprep.subr.mxu0 0.0
    %380 = vmatpush1.msra.mxu0 0.0
    %381 = vmatprep.subr.mxu0 0.0
    %382 = vmatpush1.msra.mxu0 0.0
    %383 = vmatprep.subr.mxu0 0.0
    %384 = vmatpush1.msra.mxu0 0.0
    %385 = vmatprep.subr.mxu0 0.0
    %386 = vmatpush1.msra.mxu0 0.0
    %387 = vmatprep.subr.mxu0 0.0
    %388 = vmatpush1.msra.mxu0 0.0
    %389 = vmatprep.subr.mxu0 0.0
    %390 = vmatpush1.msra.mxu0 0.0
    %391 = vmatprep.mubr.f32.mxu0 0.0
    %392 = vmatmul.mubr.f32.gmra.mrb[0].mxu0 %v325
    %v393 = vpop.f32.mrb[0].mxu0
    %v394 = vadd.f32 0.0, %v393
    %v395 = vpop.f32.mrb[0].mxu0
    %396 = vdwg.mxu0
    %397 = vrot.lane.b32.xlu0 %v135, 64
    %v398 = vpop.permute.xlu0 %397
    %v401 = vsel %vm145, %v320, 0
    %403 = vmatprep.subr.mxu0 0.0
    %404 = vmatpush1.msra.mxu0 %v398
    %405 = vmatprep.subr.mxu0 0.0
    %406 = vmatpush1.msra.mxu0 0.0
    %407 = vmatprep.subr.mxu0 0.0
    %408 = vmatpush1.msra.mxu0 0.0
    %409 = vmatprep.subr.mxu0 0.0
    %410 = vmatpush1.msra.mxu0 0.0
    %411 = vmatprep.subr.mxu0 0.0
    %412 = vmatpush1.msra.mxu0 0.0
    %413 = vmatprep.subr.mxu0 0.0
    %414 = vmatpush1.msra.mxu0 0.0
    %415 = vmatprep.subr.mxu0 0.0
    %416 = vmatpush1.msra.mxu0 0.0
    %417 = vmatprep.subr.mxu0 0.0
    %418 = vmatpush1.msra.mxu0 0.0
    %419 = vmatprep.subr.mxu0 0.0
    %420 = vmatpush1.msra.mxu0 0.0
    %421 = vmatprep.subr.mxu0 0.0
    %422 = vmatpush1.msra.mxu0 0.0
    %423 = vmatprep.subr.mxu0 0.0
    %424 = vmatpush1.msra.mxu0 0.0
    %425 = vmatprep.subr.mxu0 0.0
    %426 = vmatpush1.msra.mxu0 0.0
    %427 = vmatprep.subr.mxu0 0.0
    %428 = vmatpush1.msra.mxu0 0.0
    %429 = vmatprep.subr.mxu0 0.0
    %430 = vmatpush1.msra.mxu0 0.0
    %431 = vmatprep.subr.mxu0 0.0
    %432 = vmatpush1.msra.mxu0 0.0
    %433 = vmatprep.subr.mxu0 0.0
    %434 = vmatpush1.msra.mxu0 0.0
    %435 = vmatprep.subr.mxu0 0.0
    %436 = vmatpush1.msra.mxu0 0.0
    %437 = vmatprep.subr.mxu0 0.0
    %438 = vmatpush1.msra.mxu0 0.0
    %439 = vmatprep.subr.mxu0 0.0
    %440 = vmatpush1.msra.mxu0 0.0
    %441 = vmatprep.subr.mxu0 0.0
    %442 = vmatpush1.msra.mxu0 0.0
    %443 = vmatprep.subr.mxu0 0.0
    %444 = vmatpush1.msra.mxu0 0.0
    %445 = vmatprep.subr.mxu0 0.0
    %446 = vmatpush1.msra.mxu0 0.0
    %447 = vmatprep.subr.mxu0 0.0
    %448 = vmatpush1.msra.mxu0 0.0
    %449 = vmatprep.subr.mxu0 0.0
    %450 = vmatpush1.msra.mxu0 0.0
    %451 = vmatprep.subr.mxu0 0.0
    %452 = vmatpush1.msra.mxu0 0.0
    %453 = vmatprep.subr.mxu0 0.0
    %454 = vmatpush1.msra.mxu0 0.0
    %455 = vmatprep.subr.mxu0 0.0
    %456 = vmatpush1.msra.mxu0 0.0
    %457 = vmatprep.subr.mxu0 0.0
    %458 = vmatpush1.msra.mxu0 0.0
    %459 = vmatprep.subr.mxu0 0.0
    %460 = vmatpush1.msra.mxu0 0.0
    %461 = vmatprep.subr.mxu0 0.0
    %462 = vmatpush1.msra.mxu0 0.0
    %463 = vmatprep.subr.mxu0 0.0
    %464 = vmatpush1.msra.mxu0 0.0
    %465 = vmatprep.subr.mxu0 0.0
    %466 = vmatpush1.msra.mxu0 0.0
    %467 = vmatprep.mubr.f32.mxu0 0.0
    %468 = vmatmul.mubr.f32.gmra.mrb[0].mxu0 %v401
    %v469 = vpop.f32.mrb[0].mxu0
    %v470 = vadd.f32 0.0, %v469
    %v471 = vpop.f32.mrb[0].mxu0
    %472 = vdwg.mxu0
    %473 = vrot.lane.b32.xlu0 %v130, 120
    %v474 = vpop.permute.xlu0 %473
    %475 = vrot.lane.b32.xlu0 %v130, 88
    %v476 = vpop.permute.xlu0 %475
    %v477 = vsel %vm145, %v474, 0
    %v479 = vsel %vm145, %v476, 0
    %481 = vmatprep.subr.mxu0 0.0
    %482 = vmatpush1.xpose.msra.mxu0 %v479
    %483 = vmatprep.subr.mxu0 0.0
    %484 = vmatpush1.xpose.msra.mxu0 0.0
    %485 = vmatprep.subr.mxu0 0.0
    %486 = vmatpush1.xpose.msra.mxu0 0.0
    %487 = vmatprep.subr.mxu0 0.0
    %488 = vmatpush1.xpose.msra.mxu0 0.0
    %489 = vmatprep.subr.mxu0 0.0
    %490 = vmatpush1.xpose.msra.mxu0 0.0
    %491 = vmatprep.subr.mxu0 0.0
    %492 = vmatpush1.xpose.msra.mxu0 0.0
    %493 = vmatprep.subr.mxu0 0.0
    %494 = vmatpush1.xpose.msra.mxu0 0.0
    %495 = vmatprep.subr.mxu0 0.0
    %496 = vmatpush1.xpose.msra.mxu0 0.0
    %497 = vmatprep.subr.mxu0 0.0
    %498 = vmatpush1.xpose.msra.mxu0 0.0
    %499 = vmatprep.subr.mxu0 0.0
    %500 = vmatpush1.xpose.msra.mxu0 0.0
    %501 = vmatprep.subr.mxu0 0.0
    %502 = vmatpush1.xpose.msra.mxu0 0.0
    %503 = vmatprep.subr.mxu0 0.0
    %504 = vmatpush1.xpose.msra.mxu0 0.0
    %505 = vmatprep.subr.mxu0 0.0
    %506 = vmatpush1.xpose.msra.mxu0 0.0
    %507 = vmatprep.subr.mxu0 0.0
    %508 = vmatpush1.xpose.msra.mxu0 0.0
    %509 = vmatprep.subr.mxu0 0.0
    %510 = vmatpush1.xpose.msra.mxu0 0.0
    %511 = vmatprep.subr.mxu0 0.0
    %512 = vmatpush1.xpose.msra.mxu0 0.0
    %513 = vmatprep.subr.mxu0 0.0
    %514 = vmatpush1.xpose.msra.mxu0 0.0
    %515 = vmatprep.subr.mxu0 0.0
    %516 = vmatpush1.xpose.msra.mxu0 0.0
    %517 = vmatprep.subr.mxu0 0.0
    %518 = vmatpush1.xpose.msra.mxu0 0.0
    %519 = vmatprep.subr.mxu0 0.0
    %520 = vmatpush1.xpose.msra.mxu0 0.0
    %521 = vmatprep.subr.mxu0 0.0
    %522 = vmatpush1.xpose.msra.mxu0 0.0
    %523 = vmatprep.subr.mxu0 0.0
    %524 = vmatpush1.xpose.msra.mxu0 0.0
    %525 = vmatprep.subr.mxu0 0.0
    %526 = vmatpush1.xpose.msra.mxu0 0.0
    %527 = vmatprep.subr.mxu0 0.0
    %528 = vmatpush1.xpose.msra.mxu0 0.0
    %529 = vmatprep.subr.mxu0 0.0
    %530 = vmatpush1.xpose.msra.mxu0 0.0
    %531 = vmatprep.subr.mxu0 0.0
    %532 = vmatpush1.xpose.msra.mxu0 0.0
    %533 = vmatprep.subr.mxu0 0.0
    %534 = vmatpush1.xpose.msra.mxu0 0.0
    %535 = vmatprep.subr.mxu0 0.0
    %536 = vmatpush1.xpose.msra.mxu0 0.0
    %537 = vmatprep.subr.mxu0 0.0
    %538 = vmatpush1.xpose.msra.mxu0 0.0
    %539 = vmatprep.subr.mxu0 0.0
    %540 = vmatpush1.xpose.msra.mxu0 0.0
    %541 = vmatprep.subr.mxu0 0.0
    %542 = vmatpush1.xpose.msra.mxu0 0.0
    %543 = vmatprep.subr.mxu0 0.0
    %544 = vmatpush1.xpose.msra.mxu0 0.0
    %545 = vmatprep.mubr.f32.mxu0 0.0
    %546 = vmatmul.mubr.f32.gmra.mrb[0].mxu0 %v477
    %v547 = vpop.f32.mrb[0].mxu0
    %v548 = vadd.f32 0.0, %v547
    %v549 = vpop.f32.mrb[0].mxu0
    %550 = vdwg.mxu0
    %551 = vrot.lane.b32.xlu0 %v135, 120
    %v552 = vpop.permute.xlu0 %551
    %553 = vrot.lane.b32.xlu0 %v135, 88
    %v554 = vpop.permute.xlu0 %553
    %v555 = vsel %vm145, %v552, 0
    %v557 = vsel %vm145, %v554, 0
    %559 = vmatprep.subr.mxu0 0.0
    %560 = vmatpush1.xpose.msra.mxu0 %v557
    %561 = vmatprep.subr.mxu0 0.0
    %562 = vmatpush1.xpose.msra.mxu0 0.0
    %563 = vmatprep.subr.mxu0 0.0
    %564 = vmatpush1.xpose.msra.mxu0 0.0
    %565 = vmatprep.subr.mxu0 0.0
    %566 = vmatpush1.xpose.msra.mxu0 0.0
    %567 = vmatprep.subr.mxu0 0.0
    %568 = vmatpush1.xpose.msra.mxu0 0.0
    %569 = vmatprep.subr.mxu0 0.0
    %570 = vmatpush1.xpose.msra.mxu0 0.0
    %571 = vmatprep.subr.mxu0 0.0
    %572 = vmatpush1.xpose.msra.mxu0 0.0
    %573 = vmatprep.subr.mxu0 0.0
    %574 = vmatpush1.xpose.msra.mxu0 0.0
    %575 = vmatprep.subr.mxu0 0.0
    %576 = vmatpush1.xpose.msra.mxu0 0.0
    %577 = vmatprep.subr.mxu0 0.0
    %578 = vmatpush1.xpose.msra.mxu0 0.0
    %579 = vmatprep.subr.mxu0 0.0
    %580 = vmatpush1.xpose.msra.mxu0 0.0
    %581 = vmatprep.subr.mxu0 0.0
    %582 = vmatpush1.xpose.msra.mxu0 0.0
    %583 = vmatprep.subr.mxu0 0.0
    %584 = vmatpush1.xpose.msra.mxu0 0.0
    %585 = vmatprep.subr.mxu0 0.0
    %586 = vmatpush1.xpose.msra.mxu0 0.0
    %587 = vmatprep.subr.mxu0 0.0
    %588 = vmatpush1.xpose.msra.mxu0 0.0
    %589 = vmatprep.subr.mxu0 0.0
    %590 = vmatpush1.xpose.msra.mxu0 0.0
    %591 = vmatprep.subr.mxu0 0.0
    %592 = vmatpush1.xpose.msra.mxu0 0.0
    %593 = vmatprep.subr.mxu0 0.0
    %594 = vmatpush1.xpose.msra.mxu0 0.0
    %595 = vmatprep.subr.mxu0 0.0
    %596 = vmatpush1.xpose.msra.mxu0 0.0
    %597 = vmatprep.subr.mxu0 0.0
    %598 = vmatpush1.xpose.msra.mxu0 0.0
    %599 = vmatprep.subr.mxu0 0.0
    %600 = vmatpush1.xpose.msra.mxu0 0.0
    %601 = vmatprep.subr.mxu0 0.0
    %602 = vmatpush1.xpose.msra.mxu0 0.0
    %603 = vmatprep.subr.mxu0 0.0
    %604 = vmatpush1.xpose.msra.mxu0 0.0
    %605 = vmatprep.subr.mxu0 0.0
    %606 = vmatpush1.xpose.msra.mxu0 0.0
    %607 = vmatprep.subr.mxu0 0.0
    %608 = vmatpush1.xpose.msra.mxu0 0.0
    %609 = vmatprep.subr.mxu0 0.0
    %610 = vmatpush1.xpose.msra.mxu0 0.0
    %611 = vmatprep.subr.mxu0 0.0
    %612 = vmatpush1.xpose.msra.mxu0 0.0
    %613 = vmatprep.subr.mxu0 0.0
    %614 = vmatpush1.xpose.msra.mxu0 0.0
    %615 = vmatprep.subr.mxu0 0.0
    %616 = vmatpush1.xpose.msra.mxu0 0.0
    %617 = vmatprep.subr.mxu0 0.0
    %618 = vmatpush1.xpose.msra.mxu0 0.0
    %619 = vmatprep.subr.mxu0 0.0
    %620 = vmatpush1.xpose.msra.mxu0 0.0
    %621 = vmatprep.subr.mxu0 0.0
    %622 = vmatpush1.xpose.msra.mxu0 0.0
    %623 = vmatprep.mubr.f32.mxu0 0.0
    %624 = vmatmul.mubr.f32.gmra.mrb[0].mxu0 %v555
    %v625 = vpop.f32.mrb[0].mxu0
    %v626 = vadd.f32 0.0, %v625
    %v627 = vpop.f32.mrb[0].mxu0
    %628 = vdwg.mxu0
    %v629 = vmul.f32 %v548, 0.35355338
    %v630 = vmul.f32 %v626, 0.35355338
    %v631 = vsel %vm145, %v629, -inf
    %632 = vmax.xlane.f32.xlu0 %v631
    %v633 = vpop.xlane.xlu0 %632
    %v634 = vsel %vm145, %v630, -inf
    %635 = vmax.xlane.f32.xlu0 %v634
    %v636 = vpop.xlane.xlu0 %635
    %v637 = vsub.f32 %v629, %v633
    %v638 = vsub.f32 %v630, %v636
    %v639 = vmul.f32 %v637, 1.442695
    %v640 = vpow.pop %v639
    %v641 = vmul.f32 %v638, 1.442695
    %v642 = vpow.pop %v641
    %v643 = vsel %vm145, %v640, 0.0
    %644 = vadd.xlane.f32.xlu0 %v643
    %v645 = vpop.xlane.xlu0 %644
    %v646 = vsel %vm145, %v642, 0.0
    %647 = vadd.xlane.f32.xlu0 %v646
    %v648 = vpop.xlane.xlu0 %647
    %v649 = vrcp.pop %v645
    %v650 = vrcp.pop %v648
    %v651 = vmul.f32 %v640, %v649
    %v652 = vmul.f32 %v642, %v650
    %653 = vrot.lane.b32.xlu0 %v130, 56
    %v654 = vpop.permute.xlu0 %653
    %v657 = vsel %vm145, %v651, 0
    %659 = vmatprep.subr.mxu0 0.0
    %660 = vmatpush1.msra.mxu0 %v654
    %661 = vmatprep.subr.mxu0 0.0
    %662 = vmatpush1.msra.mxu0 0.0
    %663 = vmatprep.subr.mxu0 0.0
    %664 = vmatpush1.msra.mxu0 0.0
    %665 = vmatprep.subr.mxu0 0.0
    %666 = vmatpush1.msra.mxu0 0.0
    %667 = vmatprep.subr.mxu0 0.0
    %668 = vmatpush1.msra.mxu0 0.0
    %669 = vmatprep.subr.mxu0 0.0
    %670 = vmatpush1.msra.mxu0 0.0
    %671 = vmatprep.subr.mxu0 0.0
    %672 = vmatpush1.msra.mxu0 0.0
    %673 = vmatprep.subr.mxu0 0.0
    %674 = vmatpush1.msra.mxu0 0.0
    %675 = vmatprep.subr.mxu0 0.0
    %676 = vmatpush1.msra.mxu0 0.0
    %677 = vmatprep.subr.mxu0 0.0
    %678 = vmatpush1.msra.mxu0 0.0
    %679 = vmatprep.subr.mxu0 0.0
    %680 = vmatpush1.msra.mxu0 0.0
    %681 = vmatprep.subr.mxu0 0.0
    %682 = vmatpush1.msra.mxu0 0.0
    %683 = vmatprep.subr.mxu0 0.0
    %684 = vmatpush1.msra.mxu0 0.0
    %685 = vmatprep.subr.mxu0 0.0
    %686 = vmatpush1.msra.mxu0 0.0
    %687 = vmatprep.subr.mxu0 0.0
    %688 = vmatpush1.msra.mxu0 0.0
    %689 = vmatprep.subr.mxu0 0.0
    %690 = vmatpush1.msra.mxu0 0.0
    %691 = vmatprep.subr.mxu0 0.0
    %692 = vmatpush1.msra.mxu0 0.0
    %693 = vmatprep.subr.mxu0 0.0
    %694 = vmatpush1.msra.mxu0 0.0
    %695 = vmatprep.subr.mxu0 0.0
    %696 = vmatpush1.msra.mxu0 0.0
    %697 = vmatprep.subr.mxu0 0.0
    %698 = vmatpush1.msra.mxu0 0.0
    %699 = vmatprep.subr.mxu0 0.0
    %700 = vmatpush1.msra.mxu0 0.0
    %701 = vmatprep.subr.mxu0 0.0
    %702 = vmatpush1.msra.mxu0 0.0
    %703 = vmatprep.subr.mxu0 0.0
    %704 = vmatpush1.msra.mxu0 0.0
    %705 = vmatprep.subr.mxu0 0.0
    %706 = vmatpush1.msra.mxu0 0.0
    %707 = vmatprep.subr.mxu0 0.0
    %708 = vmatpush1.msra.mxu0 0.0
    %709 = vmatprep.subr.mxu0 0.0
    %710 = vmatpush1.msra.mxu0 0.0
    %711 = vmatprep.subr.mxu0 0.0
    %712 = vmatpush1.msra.mxu0 0.0
    %713 = vmatprep.subr.mxu0 0.0
    %714 = vmatpush1.msra.mxu0 0.0
    %715 = vmatprep.subr.mxu0 0.0
    %716 = vmatpush1.msra.mxu0 0.0
    %717 = vmatprep.subr.mxu0 0.0
    %718 = vmatpush1.msra.mxu0 0.0
    %719 = vmatprep.subr.mxu0 0.0
    %720 = vmatpush1.msra.mxu0 0.0
    %721 = vmatprep.subr.mxu0 0.0
    %722 = vmatpush1.msra.mxu0 0.0
    %723 = vmatprep.mubr.f32.mxu0 0.0
    %724 = vmatmul.mubr.f32.gmra.mrb[0].mxu0 %v657
    %v725 = vpop.f32.mrb[0].mxu0
    %v726 = vadd.f32 0.0, %v725
    %v727 = vpop.f32.mrb[0].mxu0
    %728 = vdwg.mxu0
    %729 = vrot.lane.b32.xlu0 %v135, 56
    %v730 = vpop.permute.xlu0 %729
    %v733 = vsel %vm145, %v652, 0
    %735 = vmatprep.subr.mxu0 0.0
    %736 = vmatpush1.msra.mxu0 %v730
    %737 = vmatprep.subr.mxu0 0.0
    %738 = vmatpush1.msra.mxu0 0.0
    %739 = vmatprep.subr.mxu0 0.0
    %740 = vmatpush1.msra.mxu0 0.0
    %741 = vmatprep.subr.mxu0 0.0
    %742 = vmatpush1.msra.mxu0 0.0
    %743 = vmatprep.subr.mxu0 0.0
    %744 = vmatpush1.msra.mxu0 0.0
    %745 = vmatprep.subr.mxu0 0.0
    %746 = vmatpush1.msra.mxu0 0.0
    %747 = vmatprep.subr.mxu0 0.0
    %748 = vmatpush1.msra.mxu0 0.0
    %749 = vmatprep.subr.mxu0 0.0
    %750 = vmatpush1.msra.mxu0 0.0
    %751 = vmatprep.subr.mxu0 0.0
    %752 = vmatpush1.msra.mxu0 0.0
    %753 = vmatprep.subr.mxu0 0.0
    %754 = vmatpush1.msra.mxu0 0.0
    %755 = vmatprep.subr.mxu0 0.0
    %756 = vmatpush1.msra.mxu0 0.0
    %757 = vmatprep.subr.mxu0 0.0
    %758 = vmatpush1.msra.mxu0 0.0
    %759 = vmatprep.subr.mxu0 0.0
    %760 = vmatpush1.msra.mxu0 0.0
    %761 = vmatprep.subr.mxu0 0.0
    %762 = vmatpush1.msra.mxu0 0.0
    %763 = vmatprep.subr.mxu0 0.0
    %764 = vmatpush1.msra.mxu0 0.0
    %765 = vmatprep.subr.mxu0 0.0
    %766 = vmatpush1.msra.mxu0 0.0
    %767 = vmatprep.subr.mxu0 0.0
    %768 = vmatpush1.msra.mxu0 0.0
    %769 = vmatprep.subr.mxu0 0.0
    %770 = vmatpush1.msra.mxu0 0.0
    %771 = vmatprep.subr.mxu0 0.0
    %772 = vmatpush1.msra.mxu0 0.0
    %773 = vmatprep.subr.mxu0 0.0
    %774 = vmatpush1.msra.mxu0 0.0
    %775 = vmatprep.subr.mxu0 0.0
    %776 = vmatpush1.msra.mxu0 0.0
    %777 = vmatprep.subr.mxu0 0.0
    %778 = vmatpush1.msra.mxu0 0.0
    %779 = vmatprep.subr.mxu0 0.0
    %780 = vmatpush1.msra.mxu0 0.0
    %781 = vmatprep.subr.mxu0 0.0
    %782 = vmatpush1.msra.mxu0 0.0
    %783 = vmatprep.subr.mxu0 0.0
    %784 = vmatpush1.msra.mxu0 0.0
    %785 = vmatprep.subr.mxu0 0.0
    %786 = vmatpush1.msra.mxu0 0.0
    %787 = vmatprep.subr.mxu0 0.0
    %788 = vmatpush1.msra.mxu0 0.0
    %789 = vmatprep.subr.mxu0 0.0
    %790 = vmatpush1.msra.mxu0 0.0
    %791 = vmatprep.subr.mxu0 0.0
    %792 = vmatpush1.msra.mxu0 0.0
    %793 = vmatprep.subr.mxu0 0.0
    %794 = vmatpush1.msra.mxu0 0.0
    %795 = vmatprep.subr.mxu0 0.0
    %796 = vmatpush1.msra.mxu0 0.0
    %797 = vmatprep.subr.mxu0 0.0
    %798 = vmatpush1.msra.mxu0 0.0
    %799 = vmatprep.mubr.f32.mxu0 0.0
    %800 = vmatmul.mubr.f32.gmra.mrb[0].mxu0 %v733
    %v801 = vpop.f32.mrb[0].mxu0
    %v802 = vadd.f32 0.0, %v801
    %v803 = vpop.f32.mrb[0].mxu0
    %804 = vdwg.mxu0
    %v806 = vsel %vm145, %v726, 0
    %v809 = vsel %vm145, %v802, 0
    %811 = vmatprep.subr.mxu0 0.0
    %812 = vmatpush1.msra.mxu0 %v139
    %813 = vmatprep.subr.mxu0 0.0
    %814 = vmatpush1.msra.mxu0 0.0
    %815 = vmatprep.subr.mxu0 0.0
    %816 = vmatpush1.msra.mxu0 0.0
    %817 = vmatprep.subr.mxu0 0.0
    %818 = vmatpush1.msra.mxu0 0.0
    %819 = vmatprep.subr.mxu0 0.0
    %820 = vmatpush1.msra.mxu0 0.0
    %821 = vmatprep.subr.mxu0 0.0
    %822 = vmatpush1.msra.mxu0 0.0
    %823 = vmatprep.subr.mxu0 0.0
    %824 = vmatpush1.msra.mxu0 0.0
    %825 = vmatprep.subr.mxu0 0.0
    %826 = vmatpush1.msra.mxu0 0.0
    %827 = vmatprep.subr.mxu0 0.0
    %828 = vmatpush1.msra.mxu0 0.0
    %829 = vmatprep.subr.mxu0 0.0
    %830 = vmatpush1.msra.mxu0 0.0
    %831 = vmatprep.subr.mxu0 0.0
    %832 = vmatpush1.msra.mxu0 0.0
    %833 = vmatprep.subr.mxu0 0.0
    %834 = vmatpush1.msra.mxu0 0.0
    %835 = vmatprep.subr.mxu0 0.0
    %836 = vmatpush1.msra.mxu0 0.0
    %837 = vmatprep.subr.mxu0 0.0
    %838 = vmatpush1.msra.mxu0 0.0
    %839 = vmatprep.subr.mxu0 0.0
    %840 = vmatpush1.msra.mxu0 0.0
    %841 = vmatprep.subr.mxu0 0.0
    %842 = vmatpush1.msra.mxu0 0.0
    %843 = vmatprep.subr.mxu0 0.0
    %844 = vmatpush1.msra.mxu0 0.0
    %845 = vmatprep.subr.mxu0 0.0
    %846 = vmatpush1.msra.mxu0 0.0
    %847 = vmatprep.subr.mxu0 0.0
    %848 = vmatpush1.msra.mxu0 0.0
    %849 = vmatprep.subr.mxu0 0.0
    %850 = vmatpush1.msra.mxu0 0.0
    %851 = vmatprep.subr.mxu0 0.0
    %852 = vmatpush1.msra.mxu0 0.0
    %853 = vmatprep.subr.mxu0 0.0
    %854 = vmatpush1.msra.mxu0 0.0
    %855 = vmatprep.subr.mxu0 0.0
    %856 = vmatpush1.msra.mxu0 0.0
    %857 = vmatprep.subr.mxu0 0.0
    %858 = vmatpush1.msra.mxu0 0.0
    %859 = vmatprep.subr.mxu0 0.0
    %860 = vmatpush1.msra.mxu0 0.0
    %861 = vmatprep.subr.mxu0 0.0
    %862 = vmatpush1.msra.mxu0 0.0
    %863 = vmatprep.subr.mxu0 0.0
    %864 = vmatpush1.msra.mxu0 0.0
    %865 = vmatprep.subr.mxu0 0.0
    %866 = vmatpush1.msra.mxu0 0.0
    %867 = vmatprep.subr.mxu0 0.0
    %868 = vmatpush1.msra.mxu0 0.0
    %869 = vmatprep.subr.mxu0 0.0
    %870 = vmatpush1.msra.mxu0 0.0
    %871 = vmatprep.subr.mxu0 0.0
    %872 = vmatpush1.msra.mxu0 0.0
    %873 = vmatprep.subr.mxu0 0.0
    %874 = vmatpush1.msra.mxu0 0.0
    %875 = vmatprep.mubr.f32.mxu0 0.0
    %876 = vmatmul.mubr.f32.gmra.mrb[0].mxu0 %v806
    %v877 = vpop.f32.mrb[0].mxu0
    %v878 = vadd.f32 0.0, %v877
    %v879 = vpop.f32.mrb[0].mxu0
    %880 = vmatprep.mubr.f32.mxu0 0.0
    %881 = vmatmul.mubr.f32.gmra.mrb[0].mxu0 %v809
    %v882 = vpop.f32.mrb[0].mxu0
    %v883 = vadd.f32 0.0, %v882
    %v884 = vpop.f32.mrb[0].mxu0
    %885 = vdwg.mxu0
    %v887 = vsel %vm145, %v394, 0
    %v890 = vsel %vm145, %v470, 0
    %892 = vmatprep.subr.mxu0 0.0
    %893 = vmatpush1.msra.mxu0 %v138
    %894 = vmatprep.subr.mxu0 0.0
    %895 = vmatpush1.msra.mxu0 0.0
    %896 = vmatprep.subr.mxu0 0.0
    %897 = vmatpush1.msra.mxu0 0.0
    %898 = vmatprep.subr.mxu0 0.0
    %899 = vmatpush1.msra.mxu0 0.0
    %900 = vmatprep.subr.mxu0 0.0
    %901 = vmatpush1.msra.mxu0 0.0
    %902 = vmatprep.subr.mxu0 0.0
    %903 = vmatpush1.msra.mxu0 0.0
    %904 = vmatprep.subr.mxu0 0.0
    %905 = vmatpush1.msra.mxu0 0.0
    %906 = vmatprep.subr.mxu0 0.0
    %907 = vmatpush1.msra.mxu0 0.0
    %908 = vmatprep.subr.mxu0 0.0
    %909 = vmatpush1.msra.mxu0 0.0
    %910 = vmatprep.subr.mxu0 0.0
    %911 = vmatpush1.msra.mxu0 0.0
    %912 = vmatprep.subr.mxu0 0.0
    %913 = vmatpush1.msra.mxu0 0.0
    %914 = vmatprep.subr.mxu0 0.0
    %915 = vmatpush1.msra.mxu0 0.0
    %916 = vmatprep.subr.mxu0 0.0
    %917 = vmatpush1.msra.mxu0 0.0
    %918 = vmatprep.subr.mxu0 0.0
    %919 = vmatpush1.msra.mxu0 0.0
    %920 = vmatprep.subr.mxu0 0.0
    %921 = vmatpush1.msra.mxu0 0.0
    %922 = vmatprep.subr.mxu0 0.0
    %923 = vmatpush1.msra.mxu0 0.0
    %924 = vmatprep.subr.mxu0 0.0
    %925 = vmatpush1.msra.mxu0 0.0
    %926 = vmatprep.subr.mxu0 0.0
    %927 = vmatpush1.msra.mxu0 0.0
    %928 = vmatprep.subr.mxu0 0.0
    %929 = vmatpush1.msra.mxu0 0.0
    %930 = vmatprep.subr.mxu0 0.0
    %931 = vmatpush1.msra.mxu0 0.0
    %932 = vmatprep.subr.mxu0 0.0
    %933 = vmatpush1.msra.mxu0 0.0
    %934 = vmatprep.subr.mxu0 0.0
    %935 = vmatpush1.msra.mxu0 0.0
    %936 = vmatprep.subr.mxu0 0.0
    %937 = vmatpush1.msra.mxu0 0.0
    %938 = vmatprep.subr.mxu0 0.0
    %939 = vmatpush1.msra.mxu0 0.0
    %940 = vmatprep.subr.mxu0 0.0
    %941 = vmatpush1.msra.mxu0 0.0
    %942 = vmatprep.subr.mxu0 0.0
    %943 = vmatpush1.msra.mxu0 0.0
    %944 = vmatprep.subr.mxu0 0.0
    %945 = vmatpush1.msra.mxu0 0.0
    %946 = vmatprep.subr.mxu0 0.0
    %947 = vmatpush1.msra.mxu0 0.0
    %948 = vmatprep.subr.mxu0 0.0
    %949 = vmatpush1.msra.mxu0 0.0
    %950 = vmatprep.subr.mxu0 0.0
    %951 = vmatpush1.msra.mxu0 0.0
    %952 = vmatprep.subr.mxu0 0.0
    %953 = vmatpush1.msra.mxu0 0.0
    %954 = vmatprep.subr.mxu0 0.0
    %955 = vmatpush1.msra.mxu0 0.0
    %956 = vmatprep.mubr.f32.mxu0 0.0
    %957 = vmatmul.mubr.f32.gmra.mrb[0].mxu0 %v887
    %v958 = vpop.f32.mrb[0].mxu0
    %v959 = vadd.f32 %v878, %v958
    %v960 = vpop.f32.mrb[0].mxu0
    %961 = vmatprep.mubr.f32.mxu0 0.0
    %962 = vmatmul.mubr.f32.gmra.mrb[0].mxu0 %v890
    %v963 = vpop.f32.mrb[0].mxu0
    %v964 = vadd.f32 %v883, %v963
    %v965 = vpop.f32.mrb[0].mxu0
    %966 = vdwg.mxu0
    %967 = vrot.lane.b32.xlu0 %v130, 112
    %v968 = vpop.permute.xlu0 %967
    %969 = vrot.lane.b32.xlu0 %v130, 80
    %v970 = vpop.permute.xlu0 %969
    %v971 = vsel %vm145, %v968, 0
    %v973 = vsel %vm145, %v970, 0
    %975 = vmatprep.subr.mxu0 0.0
    %976 = vmatpush1.xpose.msra.mxu0 %v973
    %977 = vmatprep.subr.mxu0 0.0
    %978 = vmatpush1.xpose.msra.mxu0 0.0
    %979 = vmatprep.subr.mxu0 0.0
    %980 = vmatpush1.xpose.msra.mxu0 0.0
    %981 = vmatprep.subr.mxu0 0.0
    %982 = vmatpush1.xpose.msra.mxu0 0.0
    %983 = vmatprep.subr.mxu0 0.0
    %984 = vmatpush1.xpose.msra.mxu0 0.0
    %985 = vmatprep.subr.mxu0 0.0
    %986 = vmatpush1.xpose.msra.mxu0 0.0
    %987 = vmatprep.subr.mxu0 0.0
    %988 = vmatpush1.xpose.msra.mxu0 0.0
    %989 = vmatprep.subr.mxu0 0.0
    %990 = vmatpush1.xpose.msra.mxu0 0.0
    %991 = vmatprep.subr.mxu0 0.0
    %992 = vmatpush1.xpose.msra.mxu0 0.0
    %993 = vmatprep.subr.mxu0 0.0
    %994 = vmatpush1.xpose.msra.mxu0 0.0
    %995 = vmatprep.subr.mxu0 0.0
    %996 = vmatpush1.xpose.msra.mxu0 0.0
    %997 = vmatprep.subr.mxu0 0.0
    %998 = vmatpush1.xpose.msra.mxu0 0.0
    %999 = vmatprep.subr.mxu0 0.0
    %1000 = vmatpush1.xpose.msra.mxu0 0.0
    %1001 = vmatprep.subr.mxu0 0.0
    %1002 = vmatpush1.xpose.msra.mxu0 0.0
    %1003 = vmatprep.subr.mxu0 0.0
    %1004 = vmatpush1.xpose.msra.mxu0 0.0
    %1005 = vmatprep.subr.mxu0 0.0
    %1006 = vmatpush1.xpose.msra.mxu0 0.0
    %1007 = vmatprep.subr.mxu0 0.0
    %1008 = vmatpush1.xpose.msra.mxu0 0.0
    %1009 = vmatprep.subr.mxu0 0.0
    %1010 = vmatpush1.xpose.msra.mxu0 0.0
    %1011 = vmatprep.subr.mxu0 0.0
    %1012 = vmatpush1.xpose.msra.mxu0 0.0
    %1013 = vmatprep.subr.mxu0 0.0
    %1014 = vmatpush1.xpose.msra.mxu0 0.0
    %1015 = vmatprep.subr.mxu0 0.0
    %1016 = vmatpush1.xpose.msra.mxu0 0.0
    %1017 = vmatprep.subr.mxu0 0.0
    %1018 = vmatpush1.xpose.msra.mxu0 0.0
    %1019 = vmatprep.subr.mxu0 0.0
    %1020 = vmatpush1.xpose.msra.mxu0 0.0
    %1021 = vmatprep.subr.mxu0 0.0
    %1022 = vmatpush1.xpose.msra.mxu0 0.0
    %1023 = vmatprep.subr.mxu0 0.0
    %1024 = vmatpush1.xpose.msra.mxu0 0.0
    %1025 = vmatprep.subr.mxu0 0.0
    %1026 = vmatpush1.xpose.msra.mxu0 0.0
    %1027 = vmatprep.subr.mxu0 0.0
    %1028 = vmatpush1.xpose.msra.mxu0 0.0
    %1029 = vmatprep.subr.mxu0 0.0
    %1030 = vmatpush1.xpose.msra.mxu0 0.0
    %1031 = vmatprep.subr.mxu0 0.0
    %1032 = vmatpush1.xpose.msra.mxu0 0.0
    %1033 = vmatprep.subr.mxu0 0.0
    %1034 = vmatpush1.xpose.msra.mxu0 0.0
    %1035 = vmatprep.subr.mxu0 0.0
    %1036 = vmatpush1.xpose.msra.mxu0 0.0
    %1037 = vmatprep.subr.mxu0 0.0
    %1038 = vmatpush1.xpose.msra.mxu0 0.0
    %1039 = vmatprep.mubr.f32.mxu0 0.0
    %1040 = vmatmul.mubr.f32.gmra.mrb[0].mxu0 %v971
    %v1041 = vpop.f32.mrb[0].mxu0
    %v1042 = vadd.f32 0.0, %v1041
    %v1043 = vpop.f32.mrb[0].mxu0
    %1044 = vdwg.mxu0
    %1045 = vrot.lane.b32.xlu0 %v135, 112
    %v1046 = vpop.permute.xlu0 %1045
    %1047 = vrot.lane.b32.xlu0 %v135, 80
    %v1048 = vpop.permute.xlu0 %1047
    %v1049 = vsel %vm145, %v1046, 0
    %v1051 = vsel %vm145, %v1048, 0
    %1053 = vmatprep.subr.mxu0 0.0
    %1054 = vmatpush1.xpose.msra.mxu0 %v1051
    %1055 = vmatprep.subr.mxu0 0.0
    %1056 = vmatpush1.xpose.msra.mxu0 0.0
    %1057 = vmatprep.subr.mxu0 0.0
    %1058 = vmatpush1.xpose.msra.mxu0 0.0
    %1059 = vmatprep.subr.mxu0 0.0
    %1060 = vmatpush1.xpose.msra.mxu0 0.0
    %1061 = vmatprep.subr.mxu0 0.0
    %1062 = vmatpush1.xpose.msra.mxu0 0.0
    %1063 = vmatprep.subr.mxu0 0.0
    %1064 = vmatpush1.xpose.msra.mxu0 0.0
    %1065 = vmatprep.subr.mxu0 0.0
    %1066 = vmatpush1.xpose.msra.mxu0 0.0
    %1067 = vmatprep.subr.mxu0 0.0
    %1068 = vmatpush1.xpose.msra.mxu0 0.0
    %1069 = vmatprep.subr.mxu0 0.0
    %1070 = vmatpush1.xpose.msra.mxu0 0.0
    %1071 = vmatprep.subr.mxu0 0.0
    %1072 = vmatpush1.xpose.msra.mxu0 0.0
    %1073 = vmatprep.subr.mxu0 0.0
    %1074 = vmatpush1.xpose.msra.mxu0 0.0
    %1075 = vmatprep.subr.mxu0 0.0
    %1076 = vmatpush1.xpose.msra.mxu0 0.0
    %1077 = vmatprep.subr.mxu0 0.0
    %1078 = vmatpush1.xpose.msra.mxu0 0.0
    %1079 = vmatprep.subr.mxu0 0.0
    %1080 = vmatpush1.xpose.msra.mxu0 0.0
    %1081 = vmatprep.subr.mxu0 0.0
    %1082 = vmatpush1.xpose.msra.mxu0 0.0
    %1083 = vmatprep.subr.mxu0 0.0
    %1084 = vmatpush1.xpose.msra.mxu0 0.0
    %1085 = vmatprep.subr.mxu0 0.0
    %1086 = vmatpush1.xpose.msra.mxu0 0.0
    %1087 = vmatprep.subr.mxu0 0.0
    %1088 = vmatpush1.xpose.msra.mxu0 0.0
    %1089 = vmatprep.subr.mxu0 0.0
    %1090 = vmatpush1.xpose.msra.mxu0 0.0
    %1091 = vmatprep.subr.mxu0 0.0
    %1092 = vmatpush1.xpose.msra.mxu0 0.0
    %1093 = vmatprep.subr.mxu0 0.0
    %1094 = vmatpush1.xpose.msra.mxu0 0.0
    %1095 = vmatprep.subr.mxu0 0.0
    %1096 = vmatpush1.xpose.msra.mxu0 0.0
    %1097 = vmatprep.subr.mxu0 0.0
    %1098 = vmatpush1.xpose.msra.mxu0 0.0
    %1099 = vmatprep.subr.mxu0 0.0
    %1100 = vmatpush1.xpose.msra.mxu0 0.0
    %1101 = vmatprep.subr.mxu0 0.0
    %1102 = vmatpush1.xpose.msra.mxu0 0.0
    %1103 = vmatprep.subr.mxu0 0.0
    %1104 = vmatpush1.xpose.msra.mxu0 0.0
    %1105 = vmatprep.subr.mxu0 0.0
    %1106 = vmatpush1.xpose.msra.mxu0 0.0
    %1107 = vmatprep.subr.mxu0 0.0
    %1108 = vmatpush1.xpose.msra.mxu0 0.0
    %1109 = vmatprep.subr.mxu0 0.0
    %1110 = vmatpush1.xpose.msra.mxu0 0.0
    %1111 = vmatprep.subr.mxu0 0.0
    %1112 = vmatpush1.xpose.msra.mxu0 0.0
    %1113 = vmatprep.subr.mxu0 0.0
    %1114 = vmatpush1.xpose.msra.mxu0 0.0
    %1115 = vmatprep.subr.mxu0 0.0
    %1116 = vmatpush1.xpose.msra.mxu0 0.0
    %1117 = vmatprep.mubr.f32.mxu0 0.0
    %1118 = vmatmul.mubr.f32.gmra.mrb[0].mxu0 %v1049
    %v1119 = vpop.f32.mrb[0].mxu0
    %v1120 = vadd.f32 0.0, %v1119
    %v1121 = vpop.f32.mrb[0].mxu0
    %1122 = vdwg.mxu0
    %v1123 = vmul.f32 %v1042, 0.35355338
    %v1124 = vmul.f32 %v1120, 0.35355338
    %v1125 = vsel %vm145, %v1123, -inf
    %1126 = vmax.xlane.f32.xlu0 %v1125
    %v1127 = vpop.xlane.xlu0 %1126
    %v1128 = vsel %vm145, %v1124, -inf
    %1129 = vmax.xlane.f32.xlu0 %v1128
    %v1130 = vpop.xlane.xlu0 %1129
    %v1131 = vsub.f32 %v1123, %v1127
    %v1132 = vsub.f32 %v1124, %v1130
    %v1133 = vmul.f32 %v1131, 1.442695
    %v1134 = vpow.pop %v1133
    %v1135 = vmul.f32 %v1132, 1.442695
    %v1136 = vpow.pop %v1135
    %v1137 = vsel %vm145, %v1134, 0.0
    %1138 = vadd.xlane.f32.xlu0 %v1137
    %v1139 = vpop.xlane.xlu0 %1138
    %v1140 = vsel %vm145, %v1136, 0.0
    %1141 = vadd.xlane.f32.xlu0 %v1140
    %v1142 = vpop.xlane.xlu0 %1141
    %v1143 = vrcp.pop %v1139
    %v1144 = vrcp.pop %v1142
    %v1145 = vmul.f32 %v1134, %v1143
    %v1146 = vmul.f32 %v1136, %v1144
    %1147 = vrot.lane.b32.xlu0 %v130, 48
    %v1148 = vpop.permute.xlu0 %1147
    %v1151 = vsel %vm145, %v1145, 0
    %1153 = vmatprep.subr.mxu0 0.0
    %1154 = vmatpush1.msra.mxu0 %v1148
    %1155 = vmatprep.subr.mxu0 0.0
    %1156 = vmatpush1.msra.mxu0 0.0
    %1157 = vmatprep.subr.mxu0 0.0
    %1158 = vmatpush1.msra.mxu0 0.0
    %1159 = vmatprep.subr.mxu0 0.0
    %1160 = vmatpush1.msra.mxu0 0.0
    %1161 = vmatprep.subr.mxu0 0.0
    %1162 = vmatpush1.msra.mxu0 0.0
    %1163 = vmatprep.subr.mxu0 0.0
    %1164 = vmatpush1.msra.mxu0 0.0
    %1165 = vmatprep.subr.mxu0 0.0
    %1166 = vmatpush1.msra.mxu0 0.0
    %1167 = vmatprep.subr.mxu0 0.0
    %1168 = vmatpush1.msra.mxu0 0.0
    %1169 = vmatprep.subr.mxu0 0.0
    %1170 = vmatpush1.msra.mxu0 0.0
    %1171 = vmatprep.subr.mxu0 0.0
    %1172 = vmatpush1.msra.mxu0 0.0
    %1173 = vmatprep.subr.mxu0 0.0
    %1174 = vmatpush1.msra.mxu0 0.0
    %1175 = vmatprep.subr.mxu0 0.0
    %1176 = vmatpush1.msra.mxu0 0.0
    %1177 = vmatprep.subr.mxu0 0.0
    %1178 = vmatpush1.msra.mxu0 0.0
    %1179 = vmatprep.subr.mxu0 0.0
    %1180 = vmatpush1.msra.mxu0 0.0
    %1181 = vmatprep.subr.mxu0 0.0
    %1182 = vmatpush1.msra.mxu0 0.0
    %1183 = vmatprep.subr.mxu0 0.0
    %1184 = vmatpush1.msra.mxu0 0.0
    %1185 = vmatprep.subr.mxu0 0.0
    %1186 = vmatpush1.msra.mxu0 0.0
    %1187 = vmatprep.subr.mxu0 0.0
    %1188 = vmatpush1.msra.mxu0 0.0
    %1189 = vmatprep.subr.mxu0 0.0
    %1190 = vmatpush1.msra.mxu0 0.0
    %1191 = vmatprep.subr.mxu0 0.0
    %1192 = vmatpush1.msra.mxu0 0.0
    %1193 = vmatprep.subr.mxu0 0.0
    %1194 = vmatpush1.msra.mxu0 0.0
    %1195 = vmatprep.subr.mxu0 0.0
    %1196 = vmatpush1.msra.mxu0 0.0
    %1197 = vmatprep.subr.mxu0 0.0
    %1198 = vmatpush1.msra.mxu0 0.0
    %1199 = vmatprep.subr.mxu0 0.0
    %1200 = vmatpush1.msra.mxu0 0.0
    %1201 = vmatprep.subr.mxu0 0.0
    %1202 = vmatpush1.msra.mxu0 0.0
    %1203 = vmatprep.subr.mxu0 0.0
    %1204 = vmatpush1.msra.mxu0 0.0
    %1205 = vmatprep.subr.mxu0 0.0
    %1206 = vmatpush1.msra.mxu0 0.0
    %1207 = vmatprep.subr.mxu0 0.0
    %1208 = vmatpush1.msra.mxu0 0.0
    %1209 = vmatprep.subr.mxu0 0.0
    %1210 = vmatpush1.msra.mxu0 0.0
    %1211 = vmatprep.subr.mxu0 0.0
    %1212 = vmatpush1.msra.mxu0 0.0
    %1213 = vmatprep.subr.mxu0 0.0
    %1214 = vmatpush1.msra.mxu0 0.0
    %1215 = vmatprep.subr.mxu0 0.0
    %1216 = vmatpush1.msra.mxu0 0.0
    %1217 = vmatprep.mubr.f32.mxu0 0.0
    %1218 = vmatmul.mubr.f32.gmra.mrb[0].mxu0 %v1151
    %v1219 = vpop.f32.mrb[0].mxu0
    %v1220 = vadd.f32 0.0, %v1219
    %v1221 = vpop.f32.mrb[0].mxu0
    %1222 = vdwg.mxu0
    %1223 = vrot.lane.b32.xlu0 %v135, 48
    %v1224 = vpop.permute.xlu0 %1223
    %v1227 = vsel %vm145, %v1146, 0
    %1229 = vmatprep.subr.mxu0 0.0
    %1230 = vmatpush1.msra.mxu0 %v1224
    %1231 = vmatprep.subr.mxu0 0.0
    %1232 = vmatpush1.msra.mxu0 0.0
    %1233 = vmatprep.subr.mxu0 0.0
    %1234 = vmatpush1.msra.mxu0 0.0
    %1235 = vmatprep.subr.mxu0 0.0
    %1236 = vmatpush1.msra.mxu0 0.0
    %1237 = vmatprep.subr.mxu0 0.0
    %1238 = vmatpush1.msra.mxu0 0.0
    %1239 = vmatprep.subr.mxu0 0.0
    %1240 = vmatpush1.msra.mxu0 0.0
    %1241 = vmatprep.subr.mxu0 0.0
    %1242 = vmatpush1.msra.mxu0 0.0
    %1243 = vmatprep.subr.mxu0 0.0
    %1244 = vmatpush1.msra.mxu0 0.0
    %1245 = vmatprep.subr.mxu0 0.0
    %1246 = vmatpush1.msra.mxu0 0.0
    %1247 = vmatprep.subr.mxu0 0.0
    %1248 = vmatpush1.msra.mxu0 0.0
    %1249 = vmatprep.subr.mxu0 0.0
    %1250 = vmatpush1.msra.mxu0 0.0
    %1251 = vmatprep.subr.mxu0 0.0
    %1252 = vmatpush1.msra.mxu0 0.0
    %1253 = vmatprep.subr.mxu0 0.0
    %1254 = vmatpush1.msra.mxu0 0.0
    %1255 = vmatprep.subr.mxu0 0.0
    %1256 = vmatpush1.msra.mxu0 0.0
    %1257 = vmatprep.subr.mxu0 0.0
    %1258 = vmatpush1.msra.mxu0 0.0
    %1259 = vmatprep.subr.mxu0 0.0
    %1260 = vmatpush1.msra.mxu0 0.0
    %1261 = vmatprep.subr.mxu0 0.0
    %1262 = vmatpush1.msra.mxu0 0.0
    %1263 = vmatprep.subr.mxu0 0.0
    %1264 = vmatpush1.msra.mxu0 0.0
    %1265 = vmatprep.subr.mxu0 0.0
    %1266 = vmatpush1.msra.mxu0 0.0
    %1267 = vmatprep.subr.mxu0 0.0
    %1268 = vmatpush1.msra.mxu0 0.0
    %1269 = vmatprep.subr.mxu0 0.0
    %1270 = vmatpush1.msra.mxu0 0.0
    %1271 = vmatprep.subr.mxu0 0.0
    %1272 = vmatpush1.msra.mxu0 0.0
    %1273 = vmatprep.subr.mxu0 0.0
    %1274 = vmatpush1.msra.mxu0 0.0
    %1275 = vmatprep.subr.mxu0 0.0
    %1276 = vmatpush1.msra.mxu0 0.0
    %1277 = vmatprep.subr.mxu0 0.0
    %1278 = vmatpush1.msra.mxu0 0.0
    %1279 = vmatprep.subr.mxu0 0.0
    %1280 = vmatpush1.msra.mxu0 0.0
    %1281 = vmatprep.subr.mxu0 0.0
    %1282 = vmatpush1.msra.mxu0 0.0
    %1283 = vmatprep.subr.mxu0 0.0
    %1284 = vmatpush1.msra.mxu0 0.0
    %1285 = vmatprep.subr.mxu0 0.0
    %1286 = vmatpush1.msra.mxu0 0.0
    %1287 = vmatprep.subr.mxu0 0.0
    %1288 = vmatpush1.msra.mxu0 0.0
    %1289 = vmatprep.subr.mxu0 0.0
    %1290 = vmatpush1.msra.mxu0 0.0
    %1291 = vmatprep.subr.mxu0 0.0
    %1292 = vmatpush1.msra.mxu0 0.0
    %1293 = vmatprep.mubr.f32.mxu0 0.0
    %1294 = vmatmul.mubr.f32.gmra.mrb[0].mxu0 %v1227
    %v1295 = vpop.f32.mrb[0].mxu0
    %v1296 = vadd.f32 0.0, %v1295
    %v1297 = vpop.f32.mrb[0].mxu0
    %1298 = vdwg.mxu0
    %v1300 = vsel %vm145, %v1220, 0
    %v1303 = vsel %vm145, %v1296, 0
    %1305 = vmatprep.subr.mxu0 0.0
    %1306 = vmatpush1.msra.mxu0 %v140
    %1307 = vmatprep.subr.mxu0 0.0
    %1308 = vmatpush1.msra.mxu0 0.0
    %1309 = vmatprep.subr.mxu0 0.0
    %1310 = vmatpush1.msra.mxu0 0.0
    %1311 = vmatprep.subr.mxu0 0.0
    %1312 = vmatpush1.msra.mxu0 0.0
    %1313 = vmatprep.subr.mxu0 0.0
    %1314 = vmatpush1.msra.mxu0 0.0
    %1315 = vmatprep.subr.mxu0 0.0
    %1316 = vmatpush1.msra.mxu0 0.0
    %1317 = vmatprep.subr.mxu0 0.0
    %1318 = vmatpush1.msra.mxu0 0.0
    %1319 = vmatprep.subr.mxu0 0.0
    %1320 = vmatpush1.msra.mxu0 0.0
    %1321 = vmatprep.subr.mxu0 0.0
    %1322 = vmatpush1.msra.mxu0 0.0
    %1323 = vmatprep.subr.mxu0 0.0
    %1324 = vmatpush1.msra.mxu0 0.0
    %1325 = vmatprep.subr.mxu0 0.0
    %1326 = vmatpush1.msra.mxu0 0.0
    %1327 = vmatprep.subr.mxu0 0.0
    %1328 = vmatpush1.msra.mxu0 0.0
    %1329 = vmatprep.subr.mxu0 0.0
    %1330 = vmatpush1.msra.mxu0 0.0
    %1331 = vmatprep.subr.mxu0 0.0
    %1332 = vmatpush1.msra.mxu0 0.0
    %1333 = vmatprep.subr.mxu0 0.0
    %1334 = vmatpush1.msra.mxu0 0.0
    %1335 = vmatprep.subr.mxu0 0.0
    %1336 = vmatpush1.msra.mxu0 0.0
    %1337 = vmatprep.subr.mxu0 0.0
    %1338 = vmatpush1.msra.mxu0 0.0
    %1339 = vmatprep.subr.mxu0 0.0
    %1340 = vmatpush1.msra.mxu0 0.0
    %1341 = vmatprep.subr.mxu0 0.0
    %1342 = vmatpush1.msra.mxu0 0.0
    %1343 = vmatprep.subr.mxu0 0.0
    %1344 = vmatpush1.msra.mxu0 0.0
    %1345 = vmatprep.subr.mxu0 0.0
    %1346 = vmatpush1.msra.mxu0 0.0
    %1347 = vmatprep.subr.mxu0 0.0
    %1348 = vmatpush1.msra.mxu0 0.0
    %1349 = vmatprep.subr.mxu0 0.0
    %1350 = vmatpush1.msra.mxu0 0.0
    %1351 = vmatprep.subr.mxu0 0.0
    %1352 = vmatpush1.msra.mxu0 0.0
    %1353 = vmatprep.subr.mxu0 0.0
    %1354 = vmatpush1.msra.mxu0 0.0
    %1355 = vmatprep.subr.mxu0 0.0
    %1356 = vmatpush1.msra.mxu0 0.0
    %1357 = vmatprep.subr.mxu0 0.0
    %1358 = vmatpush1.msra.mxu0 0.0
    %1359 = vmatprep.subr.mxu0 0.0
    %1360 = vmatpush1.msra.mxu0 0.0
    %1361 = vmatprep.subr.mxu0 0.0
    %1362 = vmatpush1.msra.mxu0 0.0
    %1363 = vmatprep.subr.mxu0 0.0
    %1364 = vmatpush1.msra.mxu0 0.0
    %1365 = vmatprep.subr.mxu0 0.0
    %1366 = vmatpush1.msra.mxu0 0.0
    %1367 = vmatprep.subr.mxu0 0.0
    %1368 = vmatpush1.msra.mxu0 0.0
    %1369 = vmatprep.mubr.f32.mxu0 0.0
    %1370 = vmatmul.mubr.f32.gmra.mrb[0].mxu0 %v1300
    %v1371 = vpop.f32.mrb[0].mxu0
    %v1372 = vadd.f32 0.0, %v1371
    %v1373 = vpop.f32.mrb[0].mxu0
    %1374 = vmatprep.mubr.f32.mxu0 0.0
    %1375 = vmatmul.mubr.f32.gmra.mrb[0].mxu0 %v1303
    %v1376 = vpop.f32.mrb[0].mxu0
    %v1377 = vadd.f32 0.0, %v1376
    %v1378 = vpop.f32.mrb[0].mxu0
    %1379 = vdwg.mxu0
    %v1380 = vadd.f32 %v959, %v1372
    %v1381 = vadd.f32 %v964, %v1377
    %1382 = vrot.lane.b32.xlu0 %v130, 104
    %v1383 = vpop.permute.xlu0 %1382
    %1384 = vrot.lane.b32.xlu0 %v130, 72
    %v1385 = vpop.permute.xlu0 %1384
    %v1386 = vsel %vm145, %v1383, 0
    %v1388 = vsel %vm145, %v1385, 0
    %1390 = vmatprep.subr.mxu0 0.0
    %1391 = vmatpush1.xpose.msra.mxu0 %v1388
    %1392 = vmatprep.subr.mxu0 0.0
    %1393 = vmatpush1.xpose.msra.mxu0 0.0
    %1394 = vmatprep.subr.mxu0 0.0
    %1395 = vmatpush1.xpose.msra.mxu0 0.0
    %1396 = vmatprep.subr.mxu0 0.0
    %1397 = vmatpush1.xpose.msra.mxu0 0.0
    %1398 = vmatprep.subr.mxu0 0.0
    %1399 = vmatpush1.xpose.msra.mxu0 0.0
    %1400 = vmatprep.subr.mxu0 0.0
    %1401 = vmatpush1.xpose.msra.mxu0 0.0
    %1402 = vmatprep.subr.mxu0 0.0
    %1403 = vmatpush1.xpose.msra.mxu0 0.0
    %1404 = vmatprep.subr.mxu0 0.0
    %1405 = vmatpush1.xpose.msra.mxu0 0.0
    %1406 = vmatprep.subr.mxu0 0.0
    %1407 = vmatpush1.xpose.msra.mxu0 0.0
    %1408 = vmatprep.subr.mxu0 0.0
    %1409 = vmatpush1.xpose.msra.mxu0 0.0
    %1410 = vmatprep.subr.mxu0 0.0
    %1411 = vmatpush1.xpose.msra.mxu0 0.0
    %1412 = vmatprep.subr.mxu0 0.0
    %1413 = vmatpush1.xpose.msra.mxu0 0.0
    %1414 = vmatprep.subr.mxu0 0.0
    %1415 = vmatpush1.xpose.msra.mxu0 0.0
    %1416 = vmatprep.subr.mxu0 0.0
    %1417 = vmatpush1.xpose.msra.mxu0 0.0
    %1418 = vmatprep.subr.mxu0 0.0
    %1419 = vmatpush1.xpose.msra.mxu0 0.0
    %1420 = vmatprep.subr.mxu0 0.0
    %1421 = vmatpush1.xpose.msra.mxu0 0.0
    %1422 = vmatprep.subr.mxu0 0.0
    %1423 = vmatpush1.xpose.msra.mxu0 0.0
    %1424 = vmatprep.subr.mxu0 0.0
    %1425 = vmatpush1.xpose.msra.mxu0 0.0
    %1426 = vmatprep.subr.mxu0 0.0
    %1427 = vmatpush1.xpose.msra.mxu0 0.0
    %1428 = vmatprep.subr.mxu0 0.0
    %1429 = vmatpush1.xpose.msra.mxu0 0.0
    %1430 = vmatprep.subr.mxu0 0.0
    %1431 = vmatpush1.xpose.msra.mxu0 0.0
    %1432 = vmatprep.subr.mxu0 0.0
    %1433 = vmatpush1.xpose.msra.mxu0 0.0
    %1434 = vmatprep.subr.mxu0 0.0
    %1435 = vmatpush1.xpose.msra.mxu0 0.0
    %1436 = vmatprep.subr.mxu0 0.0
    %1437 = vmatpush1.xpose.msra.mxu0 0.0
    %1438 = vmatprep.subr.mxu0 0.0
    %1439 = vmatpush1.xpose.msra.mxu0 0.0
    %1440 = vmatprep.subr.mxu0 0.0
    %1441 = vmatpush1.xpose.msra.mxu0 0.0
    %1442 = vmatprep.subr.mxu0 0.0
    %1443 = vmatpush1.xpose.msra.mxu0 0.0
    %1444 = vmatprep.subr.mxu0 0.0
    %1445 = vmatpush1.xpose.msra.mxu0 0.0
    %1446 = vmatprep.subr.mxu0 0.0
    %1447 = vmatpush1.xpose.msra.mxu0 0.0
    %1448 = vmatprep.subr.mxu0 0.0
    %1449 = vmatpush1.xpose.msra.mxu0 0.0
    %1450 = vmatprep.subr.mxu0 0.0
    %1451 = vmatpush1.xpose.msra.mxu0 0.0
    %1452 = vmatprep.subr.mxu0 0.0
    %1453 = vmatpush1.xpose.msra.mxu0 0.0
    %1454 = vmatprep.mubr.f32.mxu0 0.0
    %1455 = vmatmul.mubr.f32.gmra.mrb[0].mxu0 %v1386
    %v1456 = vpop.f32.mrb[0].mxu0
    %v1457 = vadd.f32 0.0, %v1456
    %v1458 = vpop.f32.mrb[0].mxu0
    %1459 = vdwg.mxu0
    %1460 = vrot.lane.b32.xlu0 %v135, 104
    %v1461 = vpop.permute.xlu0 %1460
    %1462 = vrot.lane.b32.xlu0 %v135, 72
    %v1463 = vpop.permute.xlu0 %1462
    %v1464 = vsel %vm145, %v1461, 0
    %v1466 = vsel %vm145, %v1463, 0
    %1468 = vmatprep.subr.mxu0 0.0
    %1469 = vmatpush1.xpose.msra.mxu0 %v1466
    %1470 = vmatprep.subr.mxu0 0.0
    %1471 = vmatpush1.xpose.msra.mxu0 0.0
    %1472 = vmatprep.subr.mxu0 0.0
    %1473 = vmatpush1.xpose.msra.mxu0 0.0
    %1474 = vmatprep.subr.mxu0 0.0
    %1475 = vmatpush1.xpose.msra.mxu0 0.0
    %1476 = vmatprep.subr.mxu0 0.0
    %1477 = vmatpush1.xpose.msra.mxu0 0.0
    %1478 = vmatprep.subr.mxu0 0.0
    %1479 = vmatpush1.xpose.msra.mxu0 0.0
    %1480 = vmatprep.subr.mxu0 0.0
    %1481 = vmatpush1.xpose.msra.mxu0 0.0
    %1482 = vmatprep.subr.mxu0 0.0
    %1483 = vmatpush1.xpose.msra.mxu0 0.0
    %1484 = vmatprep.subr.mxu0 0.0
    %1485 = vmatpush1.xpose.msra.mxu0 0.0
    %1486 = vmatprep.subr.mxu0 0.0
    %1487 = vmatpush1.xpose.msra.mxu0 0.0
    %1488 = vmatprep.subr.mxu0 0.0
    %1489 = vmatpush1.xpose.msra.mxu0 0.0
    %1490 = vmatprep.subr.mxu0 0.0
    %1491 = vmatpush1.xpose.msra.mxu0 0.0
    %1492 = vmatprep.subr.mxu0 0.0
    %1493 = vmatpush1.xpose.msra.mxu0 0.0
    %1494 = vmatprep.subr.mxu0 0.0
    %1495 = vmatpush1.xpose.msra.mxu0 0.0
    %1496 = vmatprep.subr.mxu0 0.0
    %1497 = vmatpush1.xpose.msra.mxu0 0.0
    %1498 = vmatprep.subr.mxu0 0.0
    %1499 = vmatpush1.xpose.msra.mxu0 0.0
    %1500 = vmatprep.subr.mxu0 0.0
    %1501 = vmatpush1.xpose.msra.mxu0 0.0
    %1502 = vmatprep.subr.mxu0 0.0
    %1503 = vmatpush1.xpose.msra.mxu0 0.0
    %1504 = vmatprep.subr.mxu0 0.0
    %1505 = vmatpush1.xpose.msra.mxu0 0.0
    %1506 = vmatprep.subr.mxu0 0.0
    %1507 = vmatpush1.xpose.msra.mxu0 0.0
    %1508 = vmatprep.subr.mxu0 0.0
    %1509 = vmatpush1.xpose.msra.mxu0 0.0
    %1510 = vmatprep.subr.mxu0 0.0
    %1511 = vmatpush1.xpose.msra.mxu0 0.0
    %1512 = vmatprep.subr.mxu0 0.0
    %1513 = vmatpush1.xpose.msra.mxu0 0.0
    %1514 = vmatprep.subr.mxu0 0.0
    %1515 = vmatpush1.xpose.msra.mxu0 0.0
    %1516 = vmatprep.subr.mxu0 0.0
    %1517 = vmatpush1.xpose.msra.mxu0 0.0
    %1518 = vmatprep.subr.mxu0 0.0
    %1519 = vmatpush1.xpose.msra.mxu0 0.0
    %1520 = vmatprep.subr.mxu0 0.0
    %1521 = vmatpush1.xpose.msra.mxu0 0.0
    %1522 = vmatprep.subr.mxu0 0.0
    %1523 = vmatpush1.xpose.msra.mxu0 0.0
    %1524 = vmatprep.subr.mxu0 0.0
    %1525 = vmatpush1.xpose.msra.mxu0 0.0
    %1526 = vmatprep.subr.mxu0 0.0
    %1527 = vmatpush1.xpose.msra.mxu0 0.0
    %1528 = vmatprep.subr.mxu0 0.0
    %1529 = vmatpush1.xpose.msra.mxu0 0.0
    %1530 = vmatprep.subr.mxu0 0.0
    %1531 = vmatpush1.xpose.msra.mxu0 0.0
    %1532 = vmatprep.mubr.f32.mxu0 0.0
    %1533 = vmatmul.mubr.f32.gmra.mrb[0].mxu0 %v1464
    %v1534 = vpop.f32.mrb[0].mxu0
    %v1535 = vadd.f32 0.0, %v1534
    %v1536 = vpop.f32.mrb[0].mxu0
    %1537 = vdwg.mxu0
    %v1538 = vmul.f32 %v1457, 0.35355338
    %v1539 = vmul.f32 %v1535, 0.35355338
    %v1540 = vsel %vm145, %v1538, -inf
    %1541 = vmax.xlane.f32.xlu0 %v1540
    %v1542 = vpop.xlane.xlu0 %1541
    %v1543 = vsel %vm145, %v1539, -inf
    %1544 = vmax.xlane.f32.xlu0 %v1543
    %v1545 = vpop.xlane.xlu0 %1544
    %v1546 = vsub.f32 %v1538, %v1542
    %v1547 = vsub.f32 %v1539, %v1545
    %v1548 = vmul.f32 %v1546, 1.442695
    %v1549 = vpow.pop %v1548
    %v1550 = vmul.f32 %v1547, 1.442695
    %v1551 = vpow.pop %v1550
    %v1552 = vsel %vm145, %v1549, 0.0
    %1553 = vadd.xlane.f32.xlu0 %v1552
    %v1554 = vpop.xlane.xlu0 %1553
    %v1555 = vsel %vm145, %v1551, 0.0
    %1556 = vadd.xlane.f32.xlu0 %v1555
    %v1557 = vpop.xlane.xlu0 %1556
    %v1558 = vrcp.pop %v1554
    %v1559 = vrcp.pop %v1557
    %v1560 = vmul.f32 %v1549, %v1558
    %v1561 = vmul.f32 %v1551, %v1559
    %1562 = vrot.lane.b32.xlu0 %v130, 40
    %v1563 = vpop.permute.xlu0 %1562
    %v1566 = vsel %vm145, %v1560, 0
    %1568 = vmatprep.subr.mxu0 0.0
    %1569 = vmatpush1.msra.mxu0 %v1563
    %1570 = vmatprep.subr.mxu0 0.0
    %1571 = vmatpush1.msra.mxu0 0.0
    %1572 = vmatprep.subr.mxu0 0.0
    %1573 = vmatpush1.msra.mxu0 0.0
    %1574 = vmatprep.subr.mxu0 0.0
    %1575 = vmatpush1.msra.mxu0 0.0
    %1576 = vmatprep.subr.mxu0 0.0
    %1577 = vmatpush1.msra.mxu0 0.0
    %1578 = vmatprep.subr.mxu0 0.0
    %1579 = vmatpush1.msra.mxu0 0.0
    %1580 = vmatprep.subr.mxu0 0.0
    %1581 = vmatpush1.msra.mxu0 0.0
    %1582 = vmatprep.subr.mxu0 0.0
    %1583 = vmatpush1.msra.mxu0 0.0
    %1584 = vmatprep.subr.mxu0 0.0
    %1585 = vmatpush1.msra.mxu0 0.0
    %1586 = vmatprep.subr.mxu0 0.0
    %1587 = vmatpush1.msra.mxu0 0.0
    %1588 = vmatprep.subr.mxu0 0.0
    %1589 = vmatpush1.msra.mxu0 0.0
    %1590 = vmatprep.subr.mxu0 0.0
    %1591 = vmatpush1.msra.mxu0 0.0
    %1592 = vmatprep.subr.mxu0 0.0
    %1593 = vmatpush1.msra.mxu0 0.0
    %1594 = vmatprep.subr.mxu0 0.0
    %1595 = vmatpush1.msra.mxu0 0.0
    %1596 = vmatprep.subr.mxu0 0.0
    %1597 = vmatpush1.msra.mxu0 0.0
    %1598 = vmatprep.subr.mxu0 0.0
    %1599 = vmatpush1.msra.mxu0 0.0
    %1600 = vmatprep.subr.mxu0 0.0
    %1601 = vmatpush1.msra.mxu0 0.0
    %1602 = vmatprep.subr.mxu0 0.0
    %1603 = vmatpush1.msra.mxu0 0.0
    %1604 = vmatprep.subr.mxu0 0.0
    %1605 = vmatpush1.msra.mxu0 0.0
    %1606 = vmatprep.subr.mxu0 0.0
    %1607 = vmatpush1.msra.mxu0 0.0
    %1608 = vmatprep.subr.mxu0 0.0
    %1609 = vmatpush1.msra.mxu0 0.0
    %1610 = vmatprep.subr.mxu0 0.0
    %1611 = vmatpush1.msra.mxu0 0.0
    %1612 = vmatprep.subr.mxu0 0.0
    %1613 = vmatpush1.msra.mxu0 0.0
    %1614 = vmatprep.subr.mxu0 0.0
    %1615 = vmatpush1.msra.mxu0 0.0
    %1616 = vmatprep.subr.mxu0 0.0
    %1617 = vmatpush1.msra.mxu0 0.0
    %1618 = vmatprep.subr.mxu0 0.0
    %1619 = vmatpush1.msra.mxu0 0.0
    %1620 = vmatprep.subr.mxu0 0.0
    %1621 = vmatpush1.msra.mxu0 0.0
    %1622 = vmatprep.subr.mxu0 0.0
    %1623 = vmatpush1.msra.mxu0 0.0
    %1624 = vmatprep.subr.mxu0 0.0
    %1625 = vmatpush1.msra.mxu0 0.0
    %1626 = vmatprep.subr.mxu0 0.0
    %1627 = vmatpush1.msra.mxu0 0.0
    %1628 = vmatprep.subr.mxu0 0.0
    %1629 = vmatpush1.msra.mxu0 0.0
    %1630 = vmatprep.subr.mxu0 0.0
    %1631 = vmatpush1.msra.mxu0 0.0
    %1632 = vmatprep.mubr.f32.mxu0 0.0
    %1633 = vmatmul.mubr.f32.gmra.mrb[0].mxu0 %v1566
    %v1634 = vpop.f32.mrb[0].mxu0
    %v1635 = vadd.f32 0.0, %v1634
    %v1636 = vpop.f32.mrb[0].mxu0
    %1637 = vdwg.mxu0
    %1638 = vrot.lane.b32.xlu0 %v135, 40
    %v1639 = vpop.permute.xlu0 %1638
    %v1642 = vsel %vm145, %v1561, 0
    %1644 = vmatprep.subr.mxu0 0.0
    %1645 = vmatpush1.msra.mxu0 %v1639
    %1646 = vmatprep.subr.mxu0 0.0
    %1647 = vmatpush1.msra.mxu0 0.0
    %1648 = vmatprep.subr.mxu0 0.0
    %1649 = vmatpush1.msra.mxu0 0.0
    %1650 = vmatprep.subr.mxu0 0.0
    %1651 = vmatpush1.msra.mxu0 0.0
    %1652 = vmatprep.subr.mxu0 0.0
    %1653 = vmatpush1.msra.mxu0 0.0
    %1654 = vmatprep.subr.mxu0 0.0
    %1655 = vmatpush1.msra.mxu0 0.0
    %1656 = vmatprep.subr.mxu0 0.0
    %1657 = vmatpush1.msra.mxu0 0.0
    %1658 = vmatprep.subr.mxu0 0.0
    %1659 = vmatpush1.msra.mxu0 0.0
    %1660 = vmatprep.subr.mxu0 0.0
    %1661 = vmatpush1.msra.mxu0 0.0
    %1662 = vmatprep.subr.mxu0 0.0
    %1663 = vmatpush1.msra.mxu0 0.0
    %1664 = vmatprep.subr.mxu0 0.0
    %1665 = vmatpush1.msra.mxu0 0.0
    %1666 = vmatprep.subr.mxu0 0.0
    %1667 = vmatpush1.msra.mxu0 0.0
    %1668 = vmatprep.subr.mxu0 0.0
    %1669 = vmatpush1.msra.mxu0 0.0
    %1670 = vmatprep.subr.mxu0 0.0
    %1671 = vmatpush1.msra.mxu0 0.0
    %1672 = vmatprep.subr.mxu0 0.0
    %1673 = vmatpush1.msra.mxu0 0.0
    %1674 = vmatprep.subr.mxu0 0.0
    %1675 = vmatpush1.msra.mxu0 0.0
    %1676 = vmatprep.subr.mxu0 0.0
    %1677 = vmatpush1.msra.mxu0 0.0
    %1678 = vmatprep.subr.mxu0 0.0
    %1679 = vmatpush1.msra.mxu0 0.0
    %1680 = vmatprep.subr.mxu0 0.0
    %1681 = vmatpush1.msra.mxu0 0.0
    %1682 = vmatprep.subr.mxu0 0.0
    %1683 = vmatpush1.msra.mxu0 0.0
    %1684 = vmatprep.subr.mxu0 0.0
    %1685 = vmatpush1.msra.mxu0 0.0
    %1686 = vmatprep.subr.mxu0 0.0
    %1687 = vmatpush1.msra.mxu0 0.0
    %1688 = vmatprep.subr.mxu0 0.0
    %1689 = vmatpush1.msra.mxu0 0.0
    %1690 = vmatprep.subr.mxu0 0.0
    %1691 = vmatpush1.msra.mxu0 0.0
    %1692 = vmatprep.subr.mxu0 0.0
    %1693 = vmatpush1.msra.mxu0 0.0
    %1694 = vmatprep.subr.mxu0 0.0
    %1695 = vmatpush1.msra.mxu0 0.0
    %1696 = vmatprep.subr.mxu0 0.0
    %1697 = vmatpush1.msra.mxu0 0.0
    %1698 = vmatprep.subr.mxu0 0.0
    %1699 = vmatpush1.msra.mxu0 0.0
    %1700 = vmatprep.subr.mxu0 0.0
    %1701 = vmatpush1.msra.mxu0 0.0
    %1702 = vmatprep.subr.mxu0 0.0
    %1703 = vmatpush1.msra.mxu0 0.0
    %1704 = vmatprep.subr.mxu0 0.0
    %1705 = vmatpush1.msra.mxu0 0.0
    %1706 = vmatprep.subr.mxu0 0.0
    %1707 = vmatpush1.msra.mxu0 0.0
    %1708 = vmatprep.mubr.f32.mxu0 0.0
    %1709 = vmatmul.mubr.f32.gmra.mrb[0].mxu0 %v1642
    %v1710 = vpop.f32.mrb[0].mxu0
    %v1711 = vadd.f32 0.0, %v1710
    %v1712 = vpop.f32.mrb[0].mxu0
    %1713 = vdwg.mxu0
    %v1715 = vsel %vm145, %v1635, 0
    %v1718 = vsel %vm145, %v1711, 0
    %1720 = vmatprep.subr.mxu0 0.0
    %1721 = vmatpush1.msra.mxu0 %v141
    %1722 = vmatprep.subr.mxu0 0.0
    %1723 = vmatpush1.msra.mxu0 0.0
    %1724 = vmatprep.subr.mxu0 0.0
    %1725 = vmatpush1.msra.mxu0 0.0
    %1726 = vmatprep.subr.mxu0 0.0
    %1727 = vmatpush1.msra.mxu0 0.0
    %1728 = vmatprep.subr.mxu0 0.0
    %1729 = vmatpush1.msra.mxu0 0.0
    %1730 = vmatprep.subr.mxu0 0.0
    %1731 = vmatpush1.msra.mxu0 0.0
    %1732 = vmatprep.subr.mxu0 0.0
    %1733 = vmatpush1.msra.mxu0 0.0
    %1734 = vmatprep.subr.mxu0 0.0
    %1735 = vmatpush1.msra.mxu0 0.0
    %1736 = vmatprep.subr.mxu0 0.0
    %1737 = vmatpush1.msra.mxu0 0.0
    %1738 = vmatprep.subr.mxu0 0.0
    %1739 = vmatpush1.msra.mxu0 0.0
    %1740 = vmatprep.subr.mxu0 0.0
    %1741 = vmatpush1.msra.mxu0 0.0
    %1742 = vmatprep.subr.mxu0 0.0
    %1743 = vmatpush1.msra.mxu0 0.0
    %1744 = vmatprep.subr.mxu0 0.0
    %1745 = vmatpush1.msra.mxu0 0.0
    %1746 = vmatprep.subr.mxu0 0.0
    %1747 = vmatpush1.msra.mxu0 0.0
    %1748 = vmatprep.subr.mxu0 0.0
    %1749 = vmatpush1.msra.mxu0 0.0
    %1750 = vmatprep.subr.mxu0 0.0
    %1751 = vmatpush1.msra.mxu0 0.0
    %1752 = vmatprep.subr.mxu0 0.0
    %1753 = vmatpush1.msra.mxu0 0.0
    %1754 = vmatprep.subr.mxu0 0.0
    %1755 = vmatpush1.msra.mxu0 0.0
    %1756 = vmatprep.subr.mxu0 0.0
    %1757 = vmatpush1.msra.mxu0 0.0
    %1758 = vmatprep.subr.mxu0 0.0
    %1759 = vmatpush1.msra.mxu0 0.0
    %1760 = vmatprep.subr.mxu0 0.0
    %1761 = vmatpush1.msra.mxu0 0.0
    %1762 = vmatprep.subr.mxu0 0.0
    %1763 = vmatpush1.msra.mxu0 0.0
    %1764 = vmatprep.subr.mxu0 0.0
    %1765 = vmatpush1.msra.mxu0 0.0
    %1766 = vmatprep.subr.mxu0 0.0
    %1767 = vmatpush1.msra.mxu0 0.0
    %1768 = vmatprep.subr.mxu0 0.0
    %1769 = vmatpush1.msra.mxu0 0.0
    %1770 = vmatprep.subr.mxu0 0.0
    %1771 = vmatpush1.msra.mxu0 0.0
    %1772 = vmatprep.subr.mxu0 0.0
    %1773 = vmatpush1.msra.mxu0 0.0
    %1774 = vmatprep.subr.mxu0 0.0
    %1775 = vmatpush1.msra.mxu0 0.0
    %1776 = vmatprep.subr.mxu0 0.0
    %1777 = vmatpush1.msra.mxu0 0.0
    %1778 = vmatprep.subr.mxu0 0.0
    %1779 = vmatpush1.msra.mxu0 0.0
    %1780 = vmatprep.subr.mxu0 0.0
    %1781 = vmatpush1.msra.mxu0 0.0
    %1782 = vmatprep.subr.mxu0 0.0
    %1783 = vmatpush1.msra.mxu0 0.0
    %1784 = vmatprep.mubr.f32.mxu0 0.0
    %1785 = vmatmul.mubr.f32.gmra.mrb[0].mxu0 %v1715
    %v1786 = vpop.f32.mrb[0].mxu0
    %v1787 = vadd.f32 0.0, %v1786
    %v1788 = vpop.f32.mrb[0].mxu0
    %1789 = vmatprep.mubr.f32.mxu0 0.0
    %1790 = vmatmul.mubr.f32.gmra.mrb[0].mxu0 %v1718
    %v1791 = vpop.f32.mrb[0].mxu0
    %v1792 = vadd.f32 0.0, %v1791
    %v1793 = vpop.f32.mrb[0].mxu0
    %1794 = vdwg.mxu0
    %v1795 = vadd.f32 %v1380, %v1787
    %v1796 = vadd.f32 %v1381, %v1792
    %v1797 = vld [vmem:[%s4] sm:$0x1]
    %v1799 = vlaneseq
    %v1800 = vshrl.u32 %v1799, 7
    %v1801 = vsub.s32 0, %v1800
    %v1802 = vrot.slane %v1797, %v1801
    %v1804 = vadd.f32 %v1795, %v1802
    %v1805 = vadd.f32 %v1796, %v1802
    %vm1806 = vcmask 261120
    %1807 = vst.msk [vmem:[#allocation5] sm:$0xff] %vm1806, %v1804
    %1808 = vst.msk [vmem:[#allocation5 + $0x8] sm:$0xff] %vm1806, %v1805
    // Predicated region
    $region26: #{parallel_attention_block.1} parent=1 // pred_check
      _
    $region27: #{parallel_attention_block.1} parent=1 // pred_check_branch
      %1810 = sbr.rel (0) target = $region29
    $region28: #{parallel_attention_block.1} parent=1 // pred_region
      %s1812 = ssub.s32 256, 256
      %1813 = vsyncadd [#allocation4], %s1812
      %s1814 = sshll.u32 [#allocation5], 4
      %s1815 = int_to_ptr.vmem [resolvable:$true] %s1814
      %1820 = dma.vmem_to_hbm [thread:$0]  %s1815, 256, %s5, [#allocation4], 128, 128, 8
    $region29: #{parallel_attention_block.1} parent=1 // pred_fallthru
      _
    // Predicated region
    $region30: #{parallel_attention_block.1} parent=1 // pred_check
      _
    $region31: #{parallel_attention_block.1} parent=1 // pred_check_branch
      %1822 = sbr.rel (0) target = $region33
    $region32: #{parallel_attention_block.1} parent=1 // pred_region
      %1823 = dma.done [#allocation4], 256
    $region33: #{parallel_attention_block.1} parent=1 // pred_fallthru
      _
    %1824 = vsyncpa [#allocation3], 1
    %1825 = vsyncpa [#allocation4], 1

</llo_original>
